<compile_context>
chip_gen: v7x
topology: tpu7x:2x2x1
jax: 0.10.0
libtpu: 0.0.40
codegen_flags: <defaults>
</compile_context>

<pallas_src>
import functools

import jax
import jax.numpy as jnp
import jax.scipy.linalg
from jax.experimental import pallas as pl
from jax.experimental.pallas import tpu as pltpu


def _round_up(x, m):
    return ((x + m - 1) // m) * m


def _cdiv(a, b):
    return (a + b - 1) // b


def _golem_colsq_kernel(x_ref, b_ref, colsq_ref, *, use_bf16):
    """One (tile_n, d_pad) slab of X against the resident (d_pad, d_pad) B.

    colsq_ref is an (8, d_pad) per-core accumulator that stays VMEM-resident
    across the inner ("arbitrary") n-tile grid axis; its 8 rows hold
    sublane-group partial sums that are reduced in the JAX wrapper.
    """
    @pl.when(pl.program_id(1) == 0)
    def _init():
        colsq_ref[...] = jnp.zeros_like(colsq_ref)

    x = x_ref[...]                                    # (tile_n, d_pad) f32
    b = b_ref[...]                                    # (d_pad, d_pad) f32
    if use_bf16:
        # bf16 MXU inputs with f32 accumulation (native fast path on v6e/v7x);
        # only enabled when d is large enough for the matmul to matter.
        xb = jnp.dot(x.astype(jnp.bfloat16), b.astype(jnp.bfloat16),
                     preferred_element_type=jnp.float32)
    else:
        xb = jnp.dot(x, b, preferred_element_type=jnp.float32)

    r = x - xb                                        # residual, f32
    sq = r * r
    tile_n, d_pad = sq.shape
    # Reduce sample rows in sublane-aligned groups of 8: pure VPU adds (no
    # cross-sublane XLU reduce); the final 8-row reduce happens in the wrapper.
    colsq_ref[...] += jnp.sum(sq.reshape(tile_n // 8, 8, d_pad), axis=0)


def golem_pallas_core(X, B, *, target_tile_n=512, vmem_budget_bytes=12 << 20):
    """Returns colsq (d,): per-column sum over samples of (X - X @ B)^2."""
    n, d = X.shape

    # Lane-dense padding: columns padded to a multiple of 128. Zero-padded
    # columns of X and zero rows/cols of B contribute exactly zero residual,
    # so the padded columns of colsq are 0 and are sliced off below.
    d_pad = _round_up(max(d, 1), 128)
    use_bf16 = d >= 256

    # Pick the n-tile: big enough to stream near the HBM roofline, small
    # enough that double-buffered X tiles + B + accumulator fit comfortably
    # in VMEM on every generation (v7x has only 64 MiB physical VMEM).
    tile_n = min(target_tile_n, _round_up(n, 8))

    def _vmem_bytes(t):
        return 4 * (2 * t * d_pad + 2 * d_pad * d_pad + 2 * 8 * d_pad)

    while tile_n > 8 and _vmem_bytes(tile_n) > vmem_budget_bytes:
        tile_n = _round_up(tile_n // 2, 8)

    total_tiles = _cdiv(n, tile_n)
    # Leading "parallel" axis: on v7x this shards the X stream across the two
    # TensorCores; on v5e/v6e (1 TC) it just runs serially at negligible cost.
    core_splits = 2 if total_tiles >= 2 else 1
    tiles_per_core = _cdiv(total_tiles, core_splits)
    n_pad = core_splits * tiles_per_core * tile_n

    X_pad = jnp.pad(X.astype(jnp.float32), ((0, n_pad - n), (0, d_pad - d)))
    B_pad = jnp.pad(B.astype(jnp.float32), ((0, d_pad - d), (0, d_pad - d)))

    kernel = functools.partial(_golem_colsq_kernel, use_bf16=use_bf16)
    cost = pl.CostEstimate(
        flops=2 * n_pad * d_pad * d_pad + 3 * n_pad * d_pad,
        transcendentals=0,
        bytes_accessed=4 * (n_pad * d_pad + d_pad * d_pad
                            + core_splits * 8 * d_pad),
    )

    colsq_parts = pl.pallas_call(
        kernel,
        out_shape=jax.ShapeDtypeStruct((core_splits * 8, d_pad), jnp.float32),
        grid=(core_splits, tiles_per_core),
        in_specs=[
            # X streamed over n-tiles (auto double-buffered pipelining).
            pl.BlockSpec((tile_n, d_pad),
                         lambda c, i: (c * tiles_per_core + i, 0)),
            # B resident across the whole grid.
            pl.BlockSpec((d_pad, d_pad), lambda c, i: (0, 0)),
        ],
        # Same block for every inner step -> VMEM-resident accumulator.
        out_specs=pl.BlockSpec((8, d_pad), lambda c, i: (c, 0)),
        compiler_params=pltpu.CompilerParams(
            dimension_semantics=("parallel", "arbitrary"),
            vmem_limit_bytes=32 * 1024 * 1024),
        cost_estimate=cost,
    )(X_pad, B_pad)

    # Reduce per-core / per-sublane-group partials and drop column padding.
    return jnp.sum(colsq_parts, axis=0)[:d]


@functools.partial(jax.jit, static_argnames=("lambda_1", "lambda_2",
                                             "equal_variances"))
def golem_forward(X, B, lambda_1, lambda_2, equal_variances=True):
    """Mirrors GolemModel.forward: returns (score, likelihood, h, B)."""
    n, d = X.shape
    colsq = golem_pallas_core(X, B)            # (d,), hot path via Pallas

    # O(d^2) B-only work — dwarfed by expm/slogdet, kept in plain JAX so the
    # streaming kernel does not redo it per n-tile.
    l1 = jnp.sum(jnp.abs(B))                   # torch.norm(B, p=1)
    _, logabsdet = jnp.linalg.slogdet(jnp.eye(d, dtype=B.dtype) - B)

    if equal_variances:
        # 0.5 * d * log(||X - X B||_F^2) - logdet
        likelihood = 0.5 * d * jnp.log(jnp.sum(colsq)) - logabsdet
    else:
        # 0.5 * sum_j log( sum_i (X - X B)_{ij}^2 ) - logdet
        likelihood = 0.5 * jnp.sum(jnp.log(colsq)) - logabsdet

    # TODO(synk): matrix_exp (Pade + scaling/squaring) and slogdet (LU) have
    # no clean Pallas equivalent; kept in plain JAX.
    h = jnp.trace(jax.scipy.linalg.expm(B * B)) - d

    score = likelihood + lambda_1 * l1 + lambda_2 * h
    return score, likelihood, h, B


def golem_reference(X, B, lambda_1, lambda_2, equal_variances=True):
    """Pure-JAX reference of the same forward pass (for validation)."""
    n, d = X.shape
    r = X - X @ B
    colsq = jnp.sum(r * r, axis=0)
    _, logabsdet = jnp.linalg.slogdet(jnp.eye(d, dtype=B.dtype) - B)
    if equal_variances:
        likelihood = 0.5 * d * jnp.log(jnp.sum(colsq)) - logabsdet
    else:
        likelihood = 0.5 * jnp.sum(jnp.log(colsq)) - logabsdet
    l1 = jnp.sum(jnp.abs(B))
    h = jnp.trace(jax.scipy.linalg.expm(B * B)) - d
    return likelihood + lambda_1 * l1 + lambda_2 * h, likelihood, h


def init_golem_params(d, seed=0, use_random_B=True):
    """Deterministic parameter init mirroring GolemModel.__init__/_preprocess:
    B (d, d) with its diagonal zeroed."""
    if use_random_B:
        key = jax.random.PRNGKey(seed)
        B = 0.1 * jax.random.normal(key, (d, d), dtype=jnp.float32)
    else:
        B = jnp.zeros((d, d), dtype=jnp.float32)
    # _preprocess: B - diag_embed(diag(B))  => zero the diagonal
    B = B - jnp.diag(jnp.diag(B))
    return B


if __name__ == "__main__":
    # Small shapes consistent with the module (n samples, d variables); n is
    # large enough to exercise multi-tile streaming + the 2-way core split.
    n, d = 2048, 16
    lambda_1, lambda_2 = 2e-2, 5.0      # GOLEM-EV hyperparameters
    equal_variances = True

    key = jax.random.PRNGKey(0)
    kx, _ = jax.random.split(key)
    X = jax.random.normal(kx, (n, d), dtype=jnp.float32)
    # Deterministic nontrivial B (acts as B_init), diagonal zeroed as in
    # GolemModel._preprocess.
    B = init_golem_params(d, seed=1, use_random_B=True)

    score, likelihood, h, B_out = golem_forward(
        X, B, lambda_1, lambda_2, equal_variances=equal_variances)
    jax.block_until_ready((score, likelihood, h, B_out))

    # Validate against the pure-JAX reference.
    ref_score, ref_like, ref_h = golem_reference(
        X, B, lambda_1, lambda_2, equal_variances=equal_variances)
    jax.block_until_ready((ref_score, ref_like, ref_h))
    denom = max(1.0, abs(float(ref_score)))
    assert abs(float(score) - float(ref_score)) / denom < 1e-3, (
        float(score), float(ref_score))

    print("KERNEL_OK")
</pallas_src>

<mosaic_0001>
module attributes {stable_mosaic.version = 11 : i64} {
  func.func @_golem_colsq_kernel(%arg0: i32, %arg1: i32, %arg2: memref<512x128xf32, #tpu.memory_space<vmem>>, %arg3: memref<128x128xf32, #tpu.memory_space<vmem>>, %arg4: memref<8x128xf32, #tpu.memory_space<vmem>>) attributes {dimension_semantics = [#tpu.dimension_semantics<parallel>, #tpu.dimension_semantics<arbitrary>], iteration_bounds = array<i64: 2, 2>, scalar_prefetch = 0 : i64, scratch_operands = 0 : i64, tpu.core_type = #tpu.core_type<tc>, window_params = [{transform_indices = @transform_0, window_bounds = array<i64: 512, 128>}, {pipeline_mode = #tpu.pipeline_mode<synchronous>, transform_indices = @transform_1, window_bounds = array<i64: 128, 128>}, {transform_indices = @transform_2, window_bounds = array<i64: 8, 128>}]} {
    %c0_i32 = arith.constant 0 : i32
    %0 = arith.cmpi eq, %arg1, %c0_i32 : i32
    %1 = arith.extui %0 : i1 to i32
    %c0_i32_0 = arith.constant 0 : i32
    %2 = arith.cmpi ne, %1, %c0_i32_0 : i32
    scf.if %2 {
      %cst_9 = arith.constant 0.000000e+00 : f32
      %13 = vector.broadcast %cst_9 : f32 to vector<8x128xf32>
      %c0_10 = arith.constant 0 : index
      %c0_11 = arith.constant 0 : index
      %14 = vector.load %arg4[%c0_10, %c0_11] : memref<8x128xf32, #tpu.memory_space<vmem>>, vector<8x128xf32>
      tpu.vector_store %arg4[%c0_10, %c0_11], %13 {strides = array<i32>} : memref<8x128xf32, #tpu.memory_space<vmem>>, vector<8x128xf32>,
    } else {
    }
    %c0 = arith.constant 0 : index
    %c0_1 = arith.constant 0 : index
    %3 = vector.load %arg2[%c0, %c0_1] : memref<512x128xf32, #tpu.memory_space<vmem>>, vector<512x128xf32>
    %c0_2 = arith.constant 0 : index
    %c0_3 = arith.constant 0 : index
    %4 = vector.load %arg3[%c0_2, %c0_3] : memref<128x128xf32, #tpu.memory_space<vmem>>, vector<128x128xf32>
    %cst = arith.constant dense<0.000000e+00> : vector<512x128xf32>
    %5 = tpu.matmul %3, %4, %cst {dimension_numbers = #tpu.dot_dimension_numbers<[1], [0], [0], [1], [0, 0, 1, 1], [], []>} : vector<512x128xf32>, vector<128x128xf32>, vector<512x128xf32> -> vector<512x128xf32>
    %6 = arith.subf %3, %5 : vector<512x128xf32>
    %7 = arith.mulf %6, %6 : vector<512x128xf32>
    %c0_4 = arith.constant 0 : index
    %c0_5 = arith.constant 0 : index
    %8 = vector.load %arg4[%c0_4, %c0_5] : memref<8x128xf32, #tpu.memory_space<vmem>>, vector<8x128xf32>
    %9 = vector.shape_cast %7 : vector<512x128xf32> to vector<64x8x128xf32>
    %cst_6 = arith.constant dense<0.000000e+00> : vector<8x128xf32>
    %10 = vector.multi_reduction <add>, %9, %cst_6 [0] : vector<64x8x128xf32> to vector<8x128xf32>
    %11 = arith.addf %8, %10 : vector<8x128xf32>
    %c0_7 = arith.constant 0 : index
    %c0_8 = arith.constant 0 : index
    %12 = vector.load %arg4[%c0_7, %c0_8] : memref<8x128xf32, #tpu.memory_space<vmem>>, vector<8x128xf32>
    tpu.vector_store %arg4[%c0_7, %c0_8], %11 {strides = array<i32>} : memref<8x128xf32, #tpu.memory_space<vmem>>, vector<8x128xf32>,
    return
  }
  func.func @transform_0(%arg0: i32, %arg1: i32) -> (i32, i32) {
    %c2_i32 = arith.constant 2 : i32
    %0 = arith.muli %arg0, %c2_i32 : i32
    %1 = arith.addi %0, %arg1 : i32
    %c0_i32 = arith.constant 0 : i32
    %c0_i32_0 = arith.constant 0 : i32
    return %1, %c0_i32 : i32, i32
  }
  func.func @transform_1(%arg0: i32, %arg1: i32) -> (i32, i32) {
    %c0_i32 = arith.constant 0 : i32
    %c0_i32_0 = arith.constant 0 : i32
    %c0_i32_1 = arith.constant 0 : i32
    return %c0_i32, %c0_i32_0 : i32, i32
  }
  func.func @transform_2(%arg0: i32, %arg1: i32) -> (i32, i32) {
    %c0_i32 = arith.constant 0 : i32
    %c0_i32_0 = arith.constant 0 : i32
    return %arg0, %c0_i32 : i32, i32
  }
}

</mosaic_0001>

<llo_original>
// kernel: custom-call.15
$region0: #{custom-call.15}
  %s0 = inlined_call_operand.vmem [shape: f32[16,16], index: 0, kind: input, shape index: {}]
  %s1 = inlined_call_operand.vmem [shape: f32[16,16], index: 1, kind: output, shape index: {0}]
  %s2 = inlined_call_operand.hbm [shape: s32[16], index: 2, kind: output, shape index: {1}]
  %s3 = inlined_call_operand.hbm [shape: s32[16], index: 3, kind: output, shape index: {2}]
  %4 = xla_tuple %s1, %s2, %s3
  $region1: #{custom-call.15} parent=0
    #allocation0 [shape = 'u8[8192]{0}', space=vmem, size = 0x2000, scoped, tag = 'operand span for operand 0']
    #allocation1 [shape = 'u8[8192]{0}', space=vmem, size = 0x2000, scoped, tag = 'operand span for operand 1']
    #allocation2 [shape = 'u8[4096]{0}', space=vmem, size = 0x1000, scoped, tag = 'operand span for operand 2']
    #allocation3 [shape = 'u8[512]{0}', space=vmem, size = 0x400, scoped, tag = 'packed  for operand 2']
    #allocation4 [shape = 's32[1]{0}', space=sflag, size = 0x4, scoped, tag = 'scoped memory for custom-call.15']
    #allocation5 [shape = 'u8[4096]{0}', space=vmem, size = 0x1000, scoped, tag = 'operand span for operand 3']
    #allocation6 [shape = 'u8[512]{0}', space=vmem, size = 0x400, scoped, tag = 'packed  for operand 3']
    #allocation7 [shape = 's32[1]{0}', space=sflag, size = 0x4, scoped, tag = 'scoped memory for custom-call.15']
    #allocation8 [shape = 's32[16,128]{1,0}', space=vmem, size = 0x2000, scoped, tag = 'scratch for permutations']
    %5 = vsyncpa [#allocation4], 0
    %6 = vsyncpa [#allocation7], 0
    %p8 = scmp.gt.s32.totalorder 16, 0
    // Predicated region
    $region2: #{custom-call.15} parent=1 // pred_check
      %p9 = pneg %p8
    $region3: #{custom-call.15} parent=1 // pred_check_branch
      %11 = sbr.rel (%p9) target = $region5
    $region4: #{custom-call.15} parent=1 // pred_region
      %s12 = sshra.s32 16, 3
      %p13 = scmp.gt.s32.totalorder %s12, 0
      // Predicated region
      $region6: #{custom-call.15} parent=4 // pred_check
        %p14 = pneg %p13
      $region7: #{custom-call.15} parent=4 // pred_check_branch
        %16 = sbr.rel (%p14) target = $region9
      $region8: #{custom-call.15} parent=4 // pred_region
        %s17 = ssub.s32 %s12, 1
        %s18 = smul.u32 %s17, 128
        %s19 = sshra.s32 %s18, 4
        %s20 = scalar_lea.vmem %s0, %s19
        %v21 = vld [vmem:[%s0] sm:$0xff]
        // While loop
        $region10: #{custom-call.15} parent=8 // loop_pre_header
          _
        $region11: #{custom-call.15} parent=8 // loop_header
          %s22 = sphi %s0, %s44
          %s23 = sphi [#allocation0], %s45
          %v24 = vphi %v21, %v46
          %s25 = ssub.s32 %s20, 64
          %p26 = scmp.gt.s32.totalorder %s22, %s25
        $region12: #{custom-call.15} parent=8 // loop_header_branch
          %28 = sbr.rel (%p26) target = $region16
        $region13: #{custom-call.15} parent=8 // loop_body
          %29 = vst [vmem:[%s23] sm:$0xff] %v24
          %v30 = vld [vmem:[%s22 + $0x8] sm:$0xff]
          %31 = vst [vmem:[%s23 + $0x8] sm:$0xff] %v30
          %v32 = vld [vmem:[%s22 + $0x10] sm:$0xff]
          %33 = vst [vmem:[%s23 + $0x10] sm:$0xff] %v32
          %v34 = vld [vmem:[%s22 + $0x18] sm:$0xff]
          %35 = vst [vmem:[%s23 + $0x18] sm:$0xff] %v34
          %v36 = vld [vmem:[%s22 + $0x20] sm:$0xff]
          %37 = vst [vmem:[%s23 + $0x20] sm:$0xff] %v36
          %v38 = vld [vmem:[%s22 + $0x28] sm:$0xff]
          %39 = vst [vmem:[%s23 + $0x28] sm:$0xff] %v38
          %v40 = vld [vmem:[%s22 + $0x30] sm:$0xff]
          %41 = vst [vmem:[%s23 + $0x30] sm:$0xff] %v40
          %v42 = vld [vmem:[%s22 + $0x38] sm:$0xff]
          %43 = vst [vmem:[%s23 + $0x38] sm:$0xff] %v42
        $region14: #{custom-call.15} parent=8 // loop_footer
          %s44 = scalar_lea.vmem %s22, 64
          %s45 = scalar_lea.vmem %s23, 64
          %v46 = vld [vmem:[%s22 + $0x40] sm:$0xff]
        $region15: #{custom-call.15} parent=8 // loop_footer_branch
          %47 = sbr.rel target = $region11
        $region16: #{custom-call.15} parent=8 // loop_exit
          _
        // While loop
        $region17: #{custom-call.15} parent=8 // loop_pre_header
          _
        $region18: #{custom-call.15} parent=8 // loop_header
          %s48 = sphi %s22, %s56
          %s49 = sphi %s23, %s57
          %v50 = vphi %v24, %v50
          %p51 = scmp.gt.s32.totalorder %s48, %s20
        $region19: #{custom-call.15} parent=8 // loop_header_branch
          %53 = sbr.rel (%p51) target = $region23
        $region20: #{custom-call.15} parent=8 // loop_body
          %v54 = vld [vmem:[%s48] sm:$0xff]
          %55 = vst [vmem:[%s49] sm:$0xff] %v54
        $region21: #{custom-call.15} parent=8 // loop_footer
          %s56 = scalar_lea.vmem %s48, 8
          %s57 = scalar_lea.vmem %s49, 8
        $region22: #{custom-call.15} parent=8 // loop_footer_branch
          %58 = sbr.rel target = $region18
        $region23: #{custom-call.15} parent=8 // loop_exit
          _
      $region9: #{custom-call.15} parent=4 // pred_fallthru
        _
      %s59 = sand.u32 16, 7
      %s60 = sshllo.u32 0, %s59
      %s61 = smul.u32 %s12, 128
      %s62 = sshra.s32 %s61, 4
      %s63 = scalar_lea.vmem [#allocation0], %s62
      %s64 = smul.u32 %s12, 128
      %s65 = sshra.s32 %s64, 4
      %s66 = scalar_lea.vmem %s0, %s65
      %v67 = vld [vmem:[%s66] sm:%s60]
      %68 = vst [vmem:[%s63] sm:%s60] %v67
    $region5: #{custom-call.15} parent=1 // pred_fallthru
      _
    %v69 = vld [vmem:[#allocation0] sm:$0xff]
    %70 = vst [vmem:[#allocation1] sm:$0xff] %v69
    %s71 = scalar_lea.vmem [#allocation1], 8
    %s72 = scalar_lea.vmem [#allocation0], 8
    %v73 = vld [vmem:[%s72] sm:$0xff]
    %74 = vst [vmem:[%s71] sm:$0xff] %v73
    %75 = vst [vmem:[#allocation2] sm:$0x1] 0
    %v76 = vlaneseq
    %v77 = vshrl.u32 %v76, 7
    %v78 = vmov %v77
    loop: start=0, step=1, limit=2
    $region24: #{custom-call.15} parent=1 // loop_pre_header
      _
    $region25: #{custom-call.15} parent=1 // loop_header
      %s80 = sphi 0, %s84
      %p81 = scmp.ge.s32.totalorder %s80, 2
    $region26: #{custom-call.15} parent=1 // loop_header_branch
      %83 = sbr.rel (%p81) target = $region30
    $region27: #{custom-call.15} parent=1 // loop_body
      %s85 = smul.addr %s80, 8
      %s86 = scalar_lea.vmem [#allocation8], %s85
      %s87 = smul.u32 %s80, 8
      %v88 = vstv %s87
      %v89 = vadd.s32 %v78, %v88
      %90 = vst [vmem:[%s86] sm:$0xff] %v89
    $region28: #{custom-call.15} parent=1 // loop_footer
      %s84 = sadd.s32 1, %s80
    $region29: #{custom-call.15} parent=1 // loop_footer_branch
      %79 = sbr.rel target = $region25
    $region30: #{custom-call.15} parent=1 // loop_exit
      _
    loop: start=0, step=1, limit=16
    $region31: #{custom-call.15} parent=1 // loop_pre_header
      _
    $region32: #{custom-call.15} parent=1 // loop_header
      %s92 = sphi 0, %s96
      %p93 = scmp.ge.s32.totalorder %s92, 16
    $region33: #{custom-call.15} parent=1 // loop_header_branch
      %95 = sbr.rel (%p93) target = $region37
    $region34: #{custom-call.15} parent=1 // loop_body
      %v97 = vstv %s92
      %v98 = vlaneseq
      %v99 = vshrl.u32 %v98, 7
      %v100 = vmov %v99
      %v101 = vld [vmem:[#allocation1] sm:$0xff]
      %v102 = vand.u32 2147483647, %v101
      %v104 = vstv %s92
      %vm105 = vcmp.ge.s32.totalorder %v100, %v104
      %vm106 = vcmp.lt.s32.totalorder %v100, 16
      %vm107 = vmand %vm105, %vm106
      %vm108 = vcmp.lt.f32.partialorder -inf, %v102
      %vm109 = vmand %vm107, %vm108
      %v110 = vsel %vm109, %v100, %v97
      %v111 = vsel %vm109, %v102, -inf
      %s112 = scalar_lea.vmem [#allocation1], 8
      %v113 = vld [vmem:[%s112] sm:$0xff]
      %v114 = vand.u32 2147483647, %v113
      %v115 = vadd.s32 %v100, 8
      %v116 = vstv %s92
      %vm117 = vcmp.ge.s32.totalorder %v115, %v116
      %vm118 = vcmp.lt.s32.totalorder %v115, 16
      %vm119 = vmand %vm117, %vm118
      %vm120 = vcmp.lt.f32.partialorder %v111, %v114
      %vm121 = vmand %vm119, %vm120
      %v122 = vsel %vm121, %v115, %v110
      %v123 = vsel %vm121, %v114, %v111
      %v124 = vrot.slane %v123, 1
      %v125 = vrot.slane %v122, 1
      %vm126 = vcmp.ge.f32.partialorder %v124, %v123
      %v127 = vsel %vm126, %v124, %v123
      %v128 = vsel %vm126, %v125, %v122
      %v129 = vrot.slane %v124, 1
      %v130 = vrot.slane %v125, 1
      %vm131 = vcmp.ge.f32.partialorder %v129, %v127
      %v132 = vsel %vm131, %v129, %v127
      %v133 = vsel %vm131, %v130, %v128
      %v134 = vrot.slane %v129, 1
      %v135 = vrot.slane %v130, 1
      %vm136 = vcmp.ge.f32.partialorder %v134, %v132
      %v137 = vsel %vm136, %v134, %v132
      %v138 = vsel %vm136, %v135, %v133
      %v139 = vrot.slane %v134, 1
      %v140 = vrot.slane %v135, 1
      %vm141 = vcmp.ge.f32.partialorder %v139, %v137
      %v142 = vsel %vm141, %v139, %v137
      %v143 = vsel %vm141, %v140, %v138
      %v144 = vrot.slane %v139, 1
      %v145 = vrot.slane %v140, 1
      %vm146 = vcmp.ge.f32.partialorder %v144, %v142
      %v147 = vsel %vm146, %v144, %v142
      %v148 = vsel %vm146, %v145, %v143
      %v149 = vrot.slane %v144, 1
      %v150 = vrot.slane %v145, 1
      %vm151 = vcmp.ge.f32.partialorder %v149, %v147
      %v152 = vsel %vm151, %v149, %v147
      %v153 = vsel %vm151, %v150, %v148
      %v154 = vrot.slane %v149, 1
      %v155 = vrot.slane %v150, 1
      %vm156 = vcmp.ge.f32.partialorder %v154, %v152
      %v157 = vsel %vm156, %v154, %v152
      %v158 = vsel %vm156, %v155, %v153
      %s159 = ssub.s32 128, %s92
      %160 = vrot.lane.b32.xlu0 %v158, %s159
      %v161 = vpop.permute.xlu0 %160
      %s162 = vtos %v161
      %v163 = vstv %s92
      %v164 = vlaneseq
      %v165 = vand.u32 %v164, 127
      %vm166 = vcmp.eq.s32.totalorder %v165, %v163
      %v167 = vstv %s162
      %v168 = vld [vmem:[#allocation2] ss:$0 sm:$0xff]
      %v169 = vsel %vm166, %v167, %v168
      %170 = vst [vmem:[#allocation2] sm:$0x1] %v169
      %s171 = scalar_lea.vmem [#allocation1], %s92
      %s172 = scalar_lea.vmem [#allocation1], %s162
      %v173 = vld [vmem:[%s171] ss:$0 sm:$0xff]
      %v174 = vld [vmem:[%s172] ss:$0 sm:$0xff]
      %175 = vst [vmem:[%s172] sm:$0x1] %v173
      %176 = vst [vmem:[%s171] sm:$0x1] %v174
      %s177 = scalar_lea.vmem [#allocation8], %s92
      %s178 = scalar_lea.vmem [#allocation8], %s162
      %v179 = vld [vmem:[%s177] ss:$0 sm:$0xff]
      %v180 = vld [vmem:[%s178] ss:$0 sm:$0xff]
      %181 = vst [vmem:[%s178] sm:$0x1] %v179
      %182 = vst [vmem:[%s177] sm:$0x1] %v180
      %vm183 = vcmp.ne.f32.partialorder %v174, 0.0
      %vm184 = vmand %vm166, %vm183
      %v185 = vsel %vm184, %v174, 1.0
      %v186 = vlaneseq
      %v187 = vand.u32 %v186, 127
      %v188 = vstv %s92
      %vm189 = vcmp.gt.s32.totalorder %v187, %v188
      %v190 = vsel %vm189, %v174, 0.0
      %v191 = vlaneseq
      %v192 = vshrl.u32 %v191, 7
      %v193 = vmov %v192
      %v194 = vld [vmem:[#allocation1] sm:$0xff]
      %v196 = vstv %s92
      %vm197 = vcmp.gt.s32.totalorder %v193, %v196
      %v198 = vsel %vm197, %v185, 1.0
      %v199 = vrcp.pop %v198
      %v200 = vmul.f32 %v194, %v199
      %vm201 = vmand %vm197, %vm166
      %v202 = vsel %vm201, %v200, 0.0
      %203 = vadd.xlane.f32.xlu0 %v202
      %v204 = vpop.xlane.xlu0 %203
      %v205 = vmul.f32 %v204, %v190
      %v206 = vsub.f32 %v200, %v205
      %207 = vst [vmem:[#allocation1] sm:$0xff] %v206
      %s208 = scalar_lea.vmem [#allocation1], 8
      %v209 = vld [vmem:[%s208] sm:$0xff]
      %v210 = vadd.s32 %v193, 8
      %v211 = vstv %s92
      %vm212 = vcmp.gt.s32.totalorder %v210, %v211
      %v213 = vsel %vm212, %v185, 1.0
      %v214 = vrcp.pop %v213
      %v215 = vmul.f32 %v209, %v214
      %vm216 = vmand %vm212, %vm166
      %v217 = vsel %vm216, %v215, 0.0
      %218 = vadd.xlane.f32.xlu0 %v217
      %v219 = vpop.xlane.xlu0 %218
      %v220 = vmul.f32 %v219, %v190
      %v221 = vsub.f32 %v215, %v220
      %222 = vst [vmem:[%s208] sm:$0xff] %v221
    $region35: #{custom-call.15} parent=1 // loop_footer
      %s96 = sadd.s32 1, %s92
    $region36: #{custom-call.15} parent=1 // loop_footer_branch
      %91 = sbr.rel target = $region32
    $region37: #{custom-call.15} parent=1 // loop_exit
      _
    %v223 = vld [vmem:[#allocation8] sm:$0xff]
    %s224 = scalar_lea.vmem [#allocation8], 8
    %v225 = vld [vmem:[%s224] sm:$0xff]
    %s226 = scalar_lea.vmem [#allocation8], 16
    %s227 = scalar_lea.vmem [#allocation8], 24
    %s228 = scalar_lea.vmem [#allocation8], 32
    %s229 = scalar_lea.vmem [#allocation8], 40
    %s230 = scalar_lea.vmem [#allocation8], 48
    %s231 = scalar_lea.vmem [#allocation8], 56
    %s232 = scalar_lea.vmem [#allocation8], 64
    %s233 = scalar_lea.vmem [#allocation8], 72
    %s234 = scalar_lea.vmem [#allocation8], 80
    %s235 = scalar_lea.vmem [#allocation8], 88
    %s236 = scalar_lea.vmem [#allocation8], 96
    %s237 = scalar_lea.vmem [#allocation8], 104
    %s238 = scalar_lea.vmem [#allocation8], 112
    %s239 = scalar_lea.vmem [#allocation8], 120
    %240 = vxpose.xlu0.b32.start [1/16] %v223, 128
    %241 = vxpose.xlu0.b32.cont [2/16] %v225, 128
    %242 = vxpose.xlu0.b32.cont [3/16] 0, 128
    %243 = vxpose.xlu0.b32.cont [4/16] 0, 128
    %244 = vxpose.xlu0.b32.cont [5/16] 0, 128
    %245 = vxpose.xlu0.b32.cont [6/16] 0, 128
    %246 = vxpose.xlu0.b32.cont [7/16] 0, 128
    %247 = vxpose.xlu0.b32.cont [8/16] 0, 128
    %248 = vxpose.xlu0.b32.cont [9/16] 0, 128
    %249 = vxpose.xlu0.b32.cont [10/16] 0, 128
    %250 = vxpose.xlu0.b32.cont [11/16] 0, 128
    %251 = vxpose.xlu0.b32.cont [12/16] 0, 128
    %252 = vxpose.xlu0.b32.cont [13/16] 0, 128
    %253 = vxpose.xlu0.b32.cont [14/16] 0, 128
    %254 = vxpose.xlu0.b32.cont [15/16] 0, 128
    %255 = vxpose.xlu0.b32.end [16/16] 0, 128
    %v256 = vpop.trf.xlu0
    %v257 = vpop.trf.xlu0
    %v258 = vpop.trf.xlu0
    %v259 = vpop.trf.xlu0
    %v260 = vpop.trf.xlu0
    %v261 = vpop.trf.xlu0
    %v262 = vpop.trf.xlu0
    %v263 = vpop.trf.xlu0
    %v264 = vpop.trf.xlu0
    %v265 = vpop.trf.xlu0
    %v266 = vpop.trf.xlu0
    %v267 = vpop.trf.xlu0
    %v268 = vpop.trf.xlu0
    %v269 = vpop.trf.xlu0
    %v270 = vpop.trf.xlu0
    %v271 = vpop.trf.xlu0
    %272 = vst [vmem:[#allocation5] sm:$0x1] %v256
    %s274 = sshllo.u32 0, 1
    %v276 = vld [vmem:[#allocation2] sm:%s274]
    %s277 = sshllo.u32 0, 1
    %278 = vst [vmem:[#allocation3] sm:%s277] %v276
    %s280 = sshllo.u32 0, 1
    %v282 = vld [vmem:[#allocation5] sm:%s280]
    %s283 = sshllo.u32 0, 1
    %284 = vst [vmem:[#allocation6] sm:%s283] %v282
    %p286 = scmp.gt.s32.totalorder 16, 0
    // Predicated region
    $region38: #{custom-call.15} parent=1 // pred_check
      %p287 = pneg %p286
    $region39: #{custom-call.15} parent=1 // pred_check_branch
      %289 = sbr.rel (%p287) target = $region41
    $region40: #{custom-call.15} parent=1 // pred_region
      %s290 = sshra.s32 16, 3
      %p291 = scmp.gt.s32.totalorder %s290, 0
      // Predicated region
      $region42: #{custom-call.15} parent=40 // pred_check
        %p292 = pneg %p291
      $region43: #{custom-call.15} parent=40 // pred_check_branch
        %294 = sbr.rel (%p292) target = $region45
      $region44: #{custom-call.15} parent=40 // pred_region
        %s295 = ssub.s32 %s290, 1
        %s296 = smul.u32 %s295, 128
        %s297 = sshra.s32 %s296, 4
        %s298 = scalar_lea.vmem [#allocation1], %s297
        %v299 = vld [vmem:[#allocation1] sm:$0xff]
        // While loop
        $region46: #{custom-call.15} parent=44 // loop_pre_header
          _
        $region47: #{custom-call.15} parent=44 // loop_header
          %s300 = sphi [#allocation1], %s322
          %s301 = sphi %s1, %s323
          %v302 = vphi %v299, %v324
          %s303 = ssub.s32 %s298, 64
          %p304 = scmp.gt.s32.totalorder %s300, %s303
        $region48: #{custom-call.15} parent=44 // loop_header_branch
          %306 = sbr.rel (%p304) target = $region52
        $region49: #{custom-call.15} parent=44 // loop_body
          %307 = vst [vmem:[%s301] sm:$0xff] %v302
          %v308 = vld [vmem:[%s300 + $0x8] sm:$0xff]
          %309 = vst [vmem:[%s301 + $0x8] sm:$0xff] %v308
          %v310 = vld [vmem:[%s300 + $0x10] sm:$0xff]
          %311 = vst [vmem:[%s301 + $0x10] sm:$0xff] %v310
          %v312 = vld [vmem:[%s300 + $0x18] sm:$0xff]
          %313 = vst [vmem:[%s301 + $0x18] sm:$0xff] %v312
          %v314 = vld [vmem:[%s300 + $0x20] sm:$0xff]
          %315 = vst [vmem:[%s301 + $0x20] sm:$0xff] %v314
          %v316 = vld [vmem:[%s300 + $0x28] sm:$0xff]
          %317 = vst [vmem:[%s301 + $0x28] sm:$0xff] %v316
          %v318 = vld [vmem:[%s300 + $0x30] sm:$0xff]
          %319 = vst [vmem:[%s301 + $0x30] sm:$0xff] %v318
          %v320 = vld [vmem:[%s300 + $0x38] sm:$0xff]
          %321 = vst [vmem:[%s301 + $0x38] sm:$0xff] %v320
        $region50: #{custom-call.15} parent=44 // loop_footer
          %s322 = scalar_lea.vmem %s300, 64
          %s323 = scalar_lea.vmem %s301, 64
          %v324 = vld [vmem:[%s300 + $0x40] sm:$0xff]
        $region51: #{custom-call.15} parent=44 // loop_footer_branch
          %325 = sbr.rel target = $region47
        $region52: #{custom-call.15} parent=44 // loop_exit
          _
        // While loop
        $region53: #{custom-call.15} parent=44 // loop_pre_header
          _
        $region54: #{custom-call.15} parent=44 // loop_header
          %s326 = sphi %s300, %s334
          %s327 = sphi %s301, %s335
          %v328 = vphi %v302, %v328
          %p329 = scmp.gt.s32.totalorder %s326, %s298
        $region55: #{custom-call.15} parent=44 // loop_header_branch
          %331 = sbr.rel (%p329) target = $region59
        $region56: #{custom-call.15} parent=44 // loop_body
          %v332 = vld [vmem:[%s326] sm:$0xff]
          %333 = vst [vmem:[%s327] sm:$0xff] %v332
        $region57: #{custom-call.15} parent=44 // loop_footer
          %s334 = scalar_lea.vmem %s326, 8
          %s335 = scalar_lea.vmem %s327, 8
        $region58: #{custom-call.15} parent=44 // loop_footer_branch
          %336 = sbr.rel target = $region54
        $region59: #{custom-call.15} parent=44 // loop_exit
          _
      $region45: #{custom-call.15} parent=40 // pred_fallthru
        _
      %s337 = sand.u32 16, 7
      %s338 = sshllo.u32 0, %s337
      %s339 = smul.u32 %s290, 128
      %s340 = sshra.s32 %s339, 4
      %s341 = scalar_lea.vmem %s1, %s340
      %s342 = smul.u32 %s290, 128
      %s343 = sshra.s32 %s342, 4
      %s344 = scalar_lea.vmem [#allocation1], %s343
      %v345 = vld [vmem:[%s344] sm:%s338]
      %346 = vst [vmem:[%s341] sm:%s338] %v345
    $region41: #{custom-call.15} parent=1 // pred_fallthru
      _
    // Predicated region
    $region60: #{custom-call.15} parent=1 // pred_check
      _
    $region61: #{custom-call.15} parent=1 // pred_check_branch
      %348 = sbr.rel (0) target = $region63
    $region62: #{custom-call.15} parent=1 // pred_region
      %s350 = ssub.s32 16, 16
      %351 = vsyncadd [#allocation4], %s350
      %s352 = sshll.u32 [#allocation3], 4
      %s353 = int_to_ptr.vmem [resolvable:$true] %s352
      %355 = dma.vmem_to_hbm [thread:$0]  %s353, 16, %s2, [#allocation4]
    $region63: #{custom-call.15} parent=1 // pred_fallthru
      _
    // Predicated region
    $region64: #{custom-call.15} parent=1 // pred_check
      _
    $region65: #{custom-call.15} parent=1 // pred_check_branch
      %357 = sbr.rel (0) target = $region67
    $region66: #{custom-call.15} parent=1 // pred_region
      %s359 = ssub.s32 16, 16
      %360 = vsyncadd [#allocation7], %s359
      %s361 = sshll.u32 [#allocation6], 4
      %s362 = int_to_ptr.vmem [resolvable:$true] %s361
      %364 = dma.vmem_to_hbm [thread:$0]  %s362, 16, %s3, [#allocation7]
    $region67: #{custom-call.15} parent=1 // pred_fallthru
      _
    // Predicated region
    $region68: #{custom-call.15} parent=1 // pred_check
      _
    $region69: #{custom-call.15} parent=1 // pred_check_branch
      %366 = sbr.rel (0) target = $region71
    $region70: #{custom-call.15} parent=1 // pred_region
      %367 = dma.done [#allocation4], 16
    $region71: #{custom-call.15} parent=1 // pred_fallthru
      _
    // Predicated region
    $region72: #{custom-call.15} parent=1 // pred_check
      _
    $region73: #{custom-call.15} parent=1 // pred_check_branch
      %369 = sbr.rel (0) target = $region75
    $region74: #{custom-call.15} parent=1 // pred_region
      %370 = dma.done [#allocation7], 16
    $region75: #{custom-call.15} parent=1 // pred_fallthru
      _
    %371 = vsyncpa [#allocation4], 1
    %372 = vsyncpa [#allocation7], 1

// kernel: golem_forward.1
$region0: #{golem_forward.1}
  #allocation0 [shape = 'u32[]', space=smem, size = 0x4, offset = 0x4, fixed_abs, tag = 'smem constant byte address 0x4 - core index']
  #allocation1 [shape = 'u32[144,128]{1,0:T(1,128)}', space=vmem, size = 0x12000, scoped, tag = 'internal scratch']
  %s0 = inlined_call_operand.vmem [shape: f32[2048,128], index: 0, kind: input, shape index: {}]
  %s1 = inlined_call_operand.vmem [shape: f32[128,128], index: 1, kind: input, shape index: {}]
  %s2 = inlined_call_operand.vmem [shape: f32[16,128], index: 2, kind: output, shape index: {}]
  %s3 = sld [smem:[#allocation0]]
  $region45: #{golem_forward.1} parent=0
    _
  %s5 = ssub.s32 1, %s3
  %s6 = scalar_select 0, %s5, %s3
  loop: start=0, step=1, limit=6
  $region2: #{golem_forward.1} parent=0 // loop_pre_header
    _
  $region3: #{golem_forward.1} parent=0 // loop_header
    %s8 = sphi 0, %s12
    %p9 = scmp.ge.s32.totalorder %s8, 6
    %s15 = sphi 0, %s27
    %s16 = sphi 0, %s23
    %s17 = sphi 0, %s15
    %s18 = sphi 0, %s16
    %s19 = sphi 0, %s17
    %s20 = sphi 0, %s18
    %s34 = sphi 0, %s36
    %s37 = sphi 0, %s34
    %s38 = sphi 0, %s37
    %s54 = sphi 0, %s38
    %s58 = sphi 0, %s58
    %s60 = sphi 0, %s58
    %s61 = sphi 0, %s60
    %s75 = sphi 0, %s61
    %s81 = sphi 0, %s83
    %s84 = sphi 0, %s81
    %s85 = sphi 0, %s84
    %s101 = sphi 0, %s85
  $region4: #{golem_forward.1} parent=0 // loop_header_branch
    %11 = sbr.rel (%p9) target = $region8
  $region5: #{golem_forward.1} parent=0 // loop_body
    %s13 = ssub.s32 %s8, 1
    %s14 = ssub.s32 %s8, 2
    %s21 = sadd.s32 1, %s16
    %p22 = scmp.ge.s32.totalorder %s21, 2
    %s23 = scalar_select %p22, 0, %s21
    %s24 = sadd.s32 1, %s15
    %s25 = scalar_select %p22, %s24, %s15
    %p26 = scmp.ge.s32.totalorder %s25, 2
    %s27 = scalar_select %p26, 0, %s25
    %s28 = smul.u32 %s15, 2
    %s29 = sadd.s32 %s28, %s16
    %s30 = smul.u32 %s27, 2
    %s31 = sadd.s32 %s30, %s23
    %s32 = ssub.s32 %s29, %s31
    %p33 = scmp.eq.s32.totalorder %s32, 0
    %s35 = sadd.s32 %s34, 1
    %s36 = scalar_select %p33, %s34, %s35
    %p39 = pneg %p33
    %p40 = scmp.eq.s32.totalorder %s8, 3
    %p41 = por %p39, %p40
    %p42 = scmp.ne.s32.totalorder %s34, %s37
    %p43 = scmp.eq.s32.totalorder %s8, 0
    %p44 = por %p42, %p43
    %p45 = scmp.ne.s32.totalorder %s34, %s37
    %p46 = scmp.eq.s32.totalorder %s13, 3
    %p47 = por %p45, %p46
    %p48 = scmp.ne.s32.totalorder %s37, %s38
    %p49 = scmp.eq.s32.totalorder %s13, 0
    %p50 = por %p48, %p49
    %p51 = scmp.ne.s32.totalorder %s37, %s38
    %p52 = scmp.eq.s32.totalorder %s14, 3
    %p53 = por %p51, %p52
    %p55 = scmp.ne.s32.totalorder %s38, %s54
    %p56 = scmp.eq.s32.totalorder %s14, 0
    %p57 = por %p55, %p56
    %s59 = sadd.s32 %s58, 1
    %p62 = scmp.eq.s32.totalorder %s8, 3
    %p63 = scmp.ne.s32.totalorder %s58, %s60
    %p64 = scmp.eq.s32.totalorder %s8, 0
    %p65 = por %p63, %p64
    %p66 = scmp.ne.s32.totalorder %s58, %s60
    %p67 = scmp.eq.s32.totalorder %s13, 3
    %p68 = por %p66, %p67
    %p69 = scmp.ne.s32.totalorder %s60, %s61
    %p70 = scmp.eq.s32.totalorder %s13, 0
    %p71 = por %p69, %p70
    %p72 = scmp.ne.s32.totalorder %s60, %s61
    %p73 = scmp.eq.s32.totalorder %s14, 3
    %p74 = por %p72, %p73
    %p76 = scmp.ne.s32.totalorder %s61, %s75
    %p77 = scmp.eq.s32.totalorder %s14, 0
    %p78 = por %p76, %p77
    %s79 = ssub.s32 %s15, %s27
    %p80 = scmp.eq.s32.totalorder %s79, 0
    %s82 = sadd.s32 %s81, 1
    %s83 = scalar_select %p80, %s81, %s82
    %p86 = pneg %p80
    %p87 = scmp.eq.s32.totalorder %s8, 3
    %p88 = por %p86, %p87
    %p89 = scmp.ne.s32.totalorder %s81, %s84
    %p90 = scmp.eq.s32.totalorder %s8, 0
    %p91 = por %p89, %p90
    %p92 = scmp.ne.s32.totalorder %s81, %s84
    %p93 = scmp.eq.s32.totalorder %s13, 3
    %p94 = por %p92, %p93
    %p95 = scmp.ne.s32.totalorder %s84, %s85
    %p96 = scmp.eq.s32.totalorder %s13, 0
    %p97 = por %p95, %p96
    %p98 = scmp.ne.s32.totalorder %s84, %s85
    %p99 = scmp.eq.s32.totalorder %s14, 3
    %p100 = por %p98, %p99
    %p102 = scmp.ne.s32.totalorder %s85, %s101
    %p103 = scmp.eq.s32.totalorder %s14, 0
    %p104 = por %p102, %p103
    %p105 = scmp.le.s32.totalorder 1, %s8
    %p106 = scmp.lt.s32.totalorder %s8, 5
    %p107 = pnand %p105, %p106
    %p108 = pneg %p107
    // Predicated region
    $region9: #{golem_forward.1} parent=5 // pred_check
      _
    $region10: #{golem_forward.1} parent=5 // pred_check_branch
      %110 = sbr.rel (%p107) target = $region12
    $region11: #{golem_forward.1} parent=5 // pred_region
      %s111 = ssub.s32 %s8, 1
      // Predicated region
      $region13: #{golem_forward.1} parent=11 // pred_check
        %p112 = pneg %p71
      $region14: #{golem_forward.1} parent=11 // pred_check_branch
        %114 = sbr.rel (%p112) target = $region16
      $region15: #{golem_forward.1} parent=11 // pred_region
        _
      $region16: #{golem_forward.1} parent=11 // pred_fallthru
        _
    $region12: #{golem_forward.1} parent=5 // pred_fallthru
      _
    %p115 = scmp.lt.s32.totalorder %s8, 4
    // Predicated region
    $region17: #{golem_forward.1} parent=5 // pred_check
      %p116 = pneg %p115
    $region18: #{golem_forward.1} parent=5 // pred_check_branch
      %118 = sbr.rel (%p116) target = $region20
    $region19: #{golem_forward.1} parent=5 // pred_region
      // Predicated region
      $region21: #{golem_forward.1} parent=19 // pred_check
        %p119 = pneg %p44
      $region22: #{golem_forward.1} parent=19 // pred_check_branch
        %121 = sbr.rel (%p119) target = $region24
      $region23: #{golem_forward.1} parent=19 // pred_region
        %s122 = smul.u32 %s15, 2
        %s123 = sadd.s32 %s122, %s16
        %s124 = smul.u32 64, %s123
        %p125 = scmp.lt.s32.totalorder %s124, 255
        %s126 = scalar_select %p125, %s124, 255
        %s127 = smul.addr %s126, 8
        %s128 = scalar_lea.vmem %s0, %s127
        %s129 = smul.u32 %s15, 2
        %s130 = sadd.s32 %s129, %s16
        %s131 = smul.u32 64, %s130
      $region24: #{golem_forward.1} parent=19 // pred_fallthru
        _
    $region20: #{golem_forward.1} parent=5 // pred_fallthru
      _
    %p132 = scmp.le.s32.totalorder 1, %s8
    %p133 = scmp.lt.s32.totalorder %s8, 5
    %p134 = pnand %p132, %p133
    %p135 = pneg %p134
    // Predicated region
    $region25: #{golem_forward.1} parent=5 // pred_check
      _
    $region26: #{golem_forward.1} parent=5 // pred_check_branch
      %137 = sbr.rel (%p134) target = $region28
    $region27: #{golem_forward.1} parent=5 // pred_region
      %s138 = ssub.s32 %s8, 1
      %s139 = smul.u32 %s17, 2
      %s140 = sadd.s32 %s139, %s18
      %s141 = smul.u32 64, %s140
      %p142 = scmp.lt.s32.totalorder %s141, 255
      %s143 = scalar_select %p142, %s141, 255
      %s144 = smul.addr %s143, 8
      %s145 = scalar_lea.vmem %s0, %s144
      %p146 = pneg %p50
      %p147 = pneg %p47
      %p148 = pneg %p71
      %p149 = pneg %p68
      %p150 = pneg %p97
      %p151 = pneg %p94
      %p152 = scmp.lt.s32.totalorder %s17, 1
      %s153 = scalar_select %p152, %s17, 1
      %s154 = smul.addr %s153, 8
      %s155 = scalar_lea.vmem %s2, %s154
      %s156 = smul.u32 %s17, 2
      %s157 = sadd.s32 %s156, %s18
      %s158 = smul.u32 64, %s157
      %p159 = scmp.lt.s32.totalorder %s158, 255
      %s160 = scalar_select %p159, %s158, 255
      %s161 = smul.addr %s160, 8
      %s162 = scalar_lea.vmem %s0, %s161
      %s163 = smul.u32 %s17, 2
      %s164 = sadd.s32 %s163, %s18
      %s165 = smul.u32 64, %s164
      %p166 = scmp.lt.s32.totalorder %s17, 1
      %s167 = scalar_select %p166, %s17, 1
      %s168 = smul.addr %s167, 8
      %s169 = scalar_lea.vmem %s2, %s168
      %p170 = scmp.eq.s32.totalorder %s18, 0
      // Predicated region
      $region29: #{golem_forward.1} parent=27 // pred_check
        %p171 = pneg %p170
      $region30: #{golem_forward.1} parent=27 // pred_check_branch
        %173 = sbr.rel (%p171) target = $region32
      $region31: #{golem_forward.1} parent=27 // pred_region
        %174 = vst [vmem:[%s169] sm:$0xff] 0.0
      $region32: #{golem_forward.1} parent=27 // pred_fallthru
        _
      %v175 = vld [vmem:[%s162] sm:$0xff]
      %v176 = vld [vmem:[%s162 + $0x8] sm:$0xff]
      %v177 = vld [vmem:[%s162 + $0x10] sm:$0xff]
      %v178 = vld [vmem:[%s162 + $0x18] sm:$0xff]
      %v179 = vld [vmem:[%s162 + $0x20] sm:$0xff]
      %v180 = vld [vmem:[%s162 + $0x28] sm:$0xff]
      %v181 = vld [vmem:[%s162 + $0x30] sm:$0xff]
      %v182 = vld [vmem:[%s162 + $0x38] sm:$0xff]
      %v183 = vld [vmem:[%s162 + $0x40] sm:$0xff]
      %v184 = vld [vmem:[%s162 + $0x48] sm:$0xff]
      %v185 = vld [vmem:[%s162 + $0x50] sm:$0xff]
      %v186 = vld [vmem:[%s162 + $0x58] sm:$0xff]
      %v187 = vld [vmem:[%s162 + $0x60] sm:$0xff]
      %v188 = vld [vmem:[%s162 + $0x68] sm:$0xff]
      %v189 = vld [vmem:[%s162 + $0x70] sm:$0xff]
      %v190 = vld [vmem:[%s162 + $0x78] sm:$0xff]
      %v191 = vld [vmem:[%s162 + $0x80] sm:$0xff]
      %v192 = vld [vmem:[%s162 + $0x88] sm:$0xff]
      %v193 = vld [vmem:[%s162 + $0x90] sm:$0xff]
      %v194 = vld [vmem:[%s162 + $0x98] sm:$0xff]
      %v195 = vld [vmem:[%s162 + $0xa0] sm:$0xff]
      %v196 = vld [vmem:[%s162 + $0xa8] sm:$0xff]
      %v197 = vld [vmem:[%s162 + $0xb0] sm:$0xff]
      %v198 = vld [vmem:[%s162 + $0xb8] sm:$0xff]
      %v199 = vld [vmem:[%s162 + $0xc0] sm:$0xff]
      %v200 = vld [vmem:[%s162 + $0xc8] sm:$0xff]
      %v201 = vld [vmem:[%s162 + $0xd0] sm:$0xff]
      %v202 = vld [vmem:[%s162 + $0xd8] sm:$0xff]
      %v203 = vld [vmem:[%s162 + $0xe0] sm:$0xff]
      %v204 = vld [vmem:[%s162 + $0xe8] sm:$0xff]
      %v205 = vld [vmem:[%s162 + $0xf0] sm:$0xff]
      %v206 = vld [vmem:[%s162 + $0xf8] sm:$0xff]
      %v207 = vld [vmem:[%s162 + $0x100] sm:$0xff]
      %v208 = vld [vmem:[%s162 + $0x108] sm:$0xff]
      %v209 = vld [vmem:[%s162 + $0x110] sm:$0xff]
      %v210 = vld [vmem:[%s162 + $0x118] sm:$0xff]
      %v211 = vld [vmem:[%s162 + $0x120] sm:$0xff]
      %v212 = vld [vmem:[%s162 + $0x128] sm:$0xff]
      %v213 = vld [vmem:[%s162 + $0x130] sm:$0xff]
      %v214 = vld [vmem:[%s162 + $0x138] sm:$0xff]
      %v215 = vld [vmem:[%s162 + $0x140] sm:$0xff]
      %v216 = vld [vmem:[%s162 + $0x148] sm:$0xff]
      %v217 = vld [vmem:[%s162 + $0x150] sm:$0xff]
      %v218 = vld [vmem:[%s162 + $0x158] sm:$0xff]
      %v219 = vld [vmem:[%s162 + $0x160] sm:$0xff]
      %v220 = vld [vmem:[%s162 + $0x168] sm:$0xff]
      %v221 = vld [vmem:[%s162 + $0x170] sm:$0xff]
      %v222 = vld [vmem:[%s162 + $0x178] sm:$0xff]
      %v223 = vld [vmem:[%s162 + $0x180] sm:$0xff]
      %v224 = vld [vmem:[%s162 + $0x188] sm:$0xff]
      %v225 = vld [vmem:[%s162 + $0x190] sm:$0xff]
      %v226 = vld [vmem:[%s162 + $0x198] sm:$0xff]
      %v227 = vld [vmem:[%s162 + $0x1a0] sm:$0xff]
      %v228 = vld [vmem:[%s162 + $0x1a8] sm:$0xff]
      %v229 = vld [vmem:[%s162 + $0x1b0] sm:$0xff]
      %v230 = vld [vmem:[%s162 + $0x1b8] sm:$0xff]
      %v231 = vld [vmem:[%s162 + $0x1c0] sm:$0xff]
      %v232 = vld [vmem:[%s162 + $0x1c8] sm:$0xff]
      %v233 = vld [vmem:[%s162 + $0x1d0] sm:$0xff]
      %v234 = vld [vmem:[%s162 + $0x1d8] sm:$0xff]
      %v235 = vld [vmem:[%s162 + $0x1e0] sm:$0xff]
      %v236 = vld [vmem:[%s162 + $0x1e8] sm:$0xff]
      %v237 = vld [vmem:[%s162 + $0x1f0] sm:$0xff]
      %v238 = vld [vmem:[%s162 + $0x1f8] sm:$0xff]
      %v239 = vld [vmem:[%s1] sm:$0xff]
      %v240 = vld [vmem:[%s1 + $0x8] sm:$0xff]
      %v241 = vld [vmem:[%s1 + $0x10] sm:$0xff]
      %v242 = vld [vmem:[%s1 + $0x18] sm:$0xff]
      %v243 = vld [vmem:[%s1 + $0x20] sm:$0xff]
      %v244 = vld [vmem:[%s1 + $0x28] sm:$0xff]
      %v245 = vld [vmem:[%s1 + $0x30] sm:$0xff]
      %v246 = vld [vmem:[%s1 + $0x38] sm:$0xff]
      %v247 = vld [vmem:[%s1 + $0x40] sm:$0xff]
      %v248 = vld [vmem:[%s1 + $0x48] sm:$0xff]
      %v249 = vld [vmem:[%s1 + $0x50] sm:$0xff]
      %v250 = vld [vmem:[%s1 + $0x58] sm:$0xff]
      %v251 = vld [vmem:[%s1 + $0x60] sm:$0xff]
      %v252 = vld [vmem:[%s1 + $0x68] sm:$0xff]
      %v253 = vld [vmem:[%s1 + $0x70] sm:$0xff]
      %v254 = vld [vmem:[%s1 + $0x78] sm:$0xff]
      %255 = vmatprep.subr.mxu0 0.0
      %256 = vmatpush1.msra.mxu0 %v239
      %257 = vmatprep.subr.mxu0 0.0
      %258 = vmatpush1.msra.mxu0 %v240
      %259 = vmatprep.subr.mxu0 0.0
      %260 = vmatpush1.msra.mxu0 %v241
      %261 = vmatprep.subr.mxu0 0.0
      %262 = vmatpush1.msra.mxu0 %v242
      %263 = vmatprep.subr.mxu0 0.0
      %264 = vmatpush1.msra.mxu0 %v243
      %265 = vmatprep.subr.mxu0 0.0
      %266 = vmatpush1.msra.mxu0 %v244
      %267 = vmatprep.subr.mxu0 0.0
      %268 = vmatpush1.msra.mxu0 %v245
      %269 = vmatprep.subr.mxu0 0.0
      %270 = vmatpush1.msra.mxu0 %v246
      %271 = vmatprep.subr.mxu0 0.0
      %272 = vmatpush1.msra.mxu0 %v247
      %273 = vmatprep.subr.mxu0 0.0
      %274 = vmatpush1.msra.mxu0 %v248
      %275 = vmatprep.subr.mxu0 0.0
      %276 = vmatpush1.msra.mxu0 %v249
      %277 = vmatprep.subr.mxu0 0.0
      %278 = vmatpush1.msra.mxu0 %v250
      %279 = vmatprep.subr.mxu0 0.0
      %280 = vmatpush1.msra.mxu0 %v251
      %281 = vmatprep.subr.mxu0 0.0
      %282 = vmatpush1.msra.mxu0 %v252
      %283 = vmatprep.subr.mxu0 0.0
      %284 = vmatpush1.msra.mxu0 %v253
      %285 = vmatprep.subr.mxu0 0.0
      %286 = vmatpush1.msra.mxu0 %v254
      %287 = vmatprep.subr.mxu0 0.0
      %288 = vmatpush1.msra.mxu0 0.0
      %289 = vmatprep.subr.mxu0 0.0
      %290 = vmatpush1.msra.mxu0 0.0
      %291 = vmatprep.subr.mxu0 0.0
      %292 = vmatpush1.msra.mxu0 0.0
      %293 = vmatprep.subr.mxu0 0.0
      %294 = vmatpush1.msra.mxu0 0.0
      %295 = vmatprep.subr.mxu0 0.0
      %296 = vmatpush1.msra.mxu0 0.0
      %297 = vmatprep.subr.mxu0 0.0
      %298 = vmatpush1.msra.mxu0 0.0
      %299 = vmatprep.subr.mxu0 0.0
      %300 = vmatpush1.msra.mxu0 0.0
      %301 = vmatprep.subr.mxu0 0.0
      %302 = vmatpush1.msra.mxu0 0.0
      %303 = vmatprep.subr.mxu0 0.0
      %304 = vmatpush1.msra.mxu0 0.0
      %305 = vmatprep.subr.mxu0 0.0
      %306 = vmatpush1.msra.mxu0 0.0
      %307 = vmatprep.subr.mxu0 0.0
      %308 = vmatpush1.msra.mxu0 0.0
      %309 = vmatprep.subr.mxu0 0.0
      %310 = vmatpush1.msra.mxu0 0.0
      %311 = vmatprep.subr.mxu0 0.0
      %312 = vmatpush1.msra.mxu0 0.0
      %313 = vmatprep.subr.mxu0 0.0
      %314 = vmatpush1.msra.mxu0 0.0
      %315 = vmatprep.subr.mxu0 0.0
      %316 = vmatpush1.msra.mxu0 0.0
      %317 = vmatprep.subr.mxu0 0.0
      %318 = vmatpush1.msra.mxu0 0.0
      %319 = vmatprep.mubr.f32.mxu0 0.0
      %320 = vmatmul.mubr.f32.gmra.mrb[0].mxu0 %v175
      %v321 = vpop.f32.mrb[0].mxu0
      %v322 = vadd.f32 0.0, %v321
      %v323 = vpop.f32.mrb[0].mxu0
      %324 = vmatprep.mubr.f32.mxu0 0.0
      %325 = vmatmul.mubr.f32.gmra.mrb[0].mxu0 %v176
      %v326 = vpop.f32.mrb[0].mxu0
      %v327 = vadd.f32 0.0, %v326
      %v328 = vpop.f32.mrb[0].mxu0
      %329 = vmatprep.mubr.f32.mxu0 0.0
      %330 = vmatmul.mubr.f32.gmra.mrb[0].mxu0 %v177
      %v331 = vpop.f32.mrb[0].mxu0
      %v332 = vadd.f32 0.0, %v331
      %v333 = vpop.f32.mrb[0].mxu0
      %334 = vmatprep.mubr.f32.mxu0 0.0
      %335 = vmatmul.mubr.f32.gmra.mrb[0].mxu0 %v178
      %v336 = vpop.f32.mrb[0].mxu0
      %v337 = vadd.f32 0.0, %v336
      %v338 = vpop.f32.mrb[0].mxu0
      %339 = vmatprep.mubr.f32.mxu0 0.0
      %340 = vmatmul.mubr.f32.gmra.mrb[0].mxu0 %v179
      %v341 = vpop.f32.mrb[0].mxu0
      %v342 = vadd.f32 0.0, %v341
      %v343 = vpop.f32.mrb[0].mxu0
      %344 = vmatprep.mubr.f32.mxu0 0.0
      %345 = vmatmul.mubr.f32.gmra.mrb[0].mxu0 %v180
      %v346 = vpop.f32.mrb[0].mxu0
      %v347 = vadd.f32 0.0, %v346
      %v348 = vpop.f32.mrb[0].mxu0
      %349 = vmatprep.mubr.f32.mxu0 0.0
      %350 = vmatmul.mubr.f32.gmra.mrb[0].mxu0 %v181
      %v351 = vpop.f32.mrb[0].mxu0
      %v352 = vadd.f32 0.0, %v351
      %v353 = vpop.f32.mrb[0].mxu0
      %354 = vmatprep.mubr.f32.mxu0 0.0
      %355 = vmatmul.mubr.f32.gmra.mrb[0].mxu0 %v182
      %v356 = vpop.f32.mrb[0].mxu0
      %v357 = vadd.f32 0.0, %v356
      %v358 = vpop.f32.mrb[0].mxu0
      %359 = vmatprep.mubr.f32.mxu0 0.0
      %360 = vmatmul.mubr.f32.gmra.mrb[0].mxu0 %v183
      %v361 = vpop.f32.mrb[0].mxu0
      %v362 = vadd.f32 0.0, %v361
      %v363 = vpop.f32.mrb[0].mxu0
      %364 = vmatprep.mubr.f32.mxu0 0.0
      %365 = vmatmul.mubr.f32.gmra.mrb[0].mxu0 %v184
      %v366 = vpop.f32.mrb[0].mxu0
      %v367 = vadd.f32 0.0, %v366
      %v368 = vpop.f32.mrb[0].mxu0
      %369 = vmatprep.mubr.f32.mxu0 0.0
      %370 = vmatmul.mubr.f32.gmra.mrb[0].mxu0 %v185
      %v371 = vpop.f32.mrb[0].mxu0
      %v372 = vadd.f32 0.0, %v371
      %v373 = vpop.f32.mrb[0].mxu0
      %374 = vmatprep.mubr.f32.mxu0 0.0
      %375 = vmatmul.mubr.f32.gmra.mrb[0].mxu0 %v186
      %v376 = vpop.f32.mrb[0].mxu0
      %v377 = vadd.f32 0.0, %v376
      %v378 = vpop.f32.mrb[0].mxu0
      %379 = vmatprep.mubr.f32.mxu0 0.0
      %380 = vmatmul.mubr.f32.gmra.mrb[0].mxu0 %v187
      %v381 = vpop.f32.mrb[0].mxu0
      %v382 = vadd.f32 0.0, %v381
      %v383 = vpop.f32.mrb[0].mxu0
      %384 = vmatprep.mubr.f32.mxu0 0.0
      %385 = vmatmul.mubr.f32.gmra.mrb[0].mxu0 %v188
      %v386 = vpop.f32.mrb[0].mxu0
      %v387 = vadd.f32 0.0, %v386
      %v388 = vpop.f32.mrb[0].mxu0
      %389 = vmatprep.mubr.f32.mxu0 0.0
      %390 = vmatmul.mubr.f32.gmra.mrb[0].mxu0 %v189
      %v391 = vpop.f32.mrb[0].mxu0
      %v392 = vadd.f32 0.0, %v391
      %v393 = vpop.f32.mrb[0].mxu0
      %394 = vmatprep.mubr.f32.mxu0 0.0
      %395 = vmatmul.mubr.f32.gmra.mrb[0].mxu0 %v190
      %v396 = vpop.f32.mrb[0].mxu0
      %v397 = vadd.f32 0.0, %v396
      %v398 = vpop.f32.mrb[0].mxu0
      %399 = vmatprep.mubr.f32.mxu0 0.0
      %400 = vmatmul.mubr.f32.gmra.mrb[0].mxu0 %v191
      %v401 = vpop.f32.mrb[0].mxu0
      %v402 = vadd.f32 0.0, %v401
      %v403 = vpop.f32.mrb[0].mxu0
      %404 = vmatprep.mubr.f32.mxu0 0.0
      %405 = vmatmul.mubr.f32.gmra.mrb[0].mxu0 %v192
      %v406 = vpop.f32.mrb[0].mxu0
      %v407 = vadd.f32 0.0, %v406
      %v408 = vpop.f32.mrb[0].mxu0
      %409 = vmatprep.mubr.f32.mxu0 0.0
      %410 = vmatmul.mubr.f32.gmra.mrb[0].mxu0 %v193
      %v411 = vpop.f32.mrb[0].mxu0
      %v412 = vadd.f32 0.0, %v411
      %v413 = vpop.f32.mrb[0].mxu0
      %414 = vmatprep.mubr.f32.mxu0 0.0
      %415 = vmatmul.mubr.f32.gmra.mrb[0].mxu0 %v194
      %v416 = vpop.f32.mrb[0].mxu0
      %v417 = vadd.f32 0.0, %v416
      %v418 = vpop.f32.mrb[0].mxu0
      %419 = vmatprep.mubr.f32.mxu0 0.0
      %420 = vmatmul.mubr.f32.gmra.mrb[0].mxu0 %v195
      %v421 = vpop.f32.mrb[0].mxu0
      %v422 = vadd.f32 0.0, %v421
      %v423 = vpop.f32.mrb[0].mxu0
      %424 = vmatprep.mubr.f32.mxu0 0.0
      %425 = vmatmul.mubr.f32.gmra.mrb[0].mxu0 %v196
      %v426 = vpop.f32.mrb[0].mxu0
      %v427 = vadd.f32 0.0, %v426
      %v428 = vpop.f32.mrb[0].mxu0
      %429 = vmatprep.mubr.f32.mxu0 0.0
      %430 = vmatmul.mubr.f32.gmra.mrb[0].mxu0 %v197
      %v431 = vpop.f32.mrb[0].mxu0
      %v432 = vadd.f32 0.0, %v431
      %v433 = vpop.f32.mrb[0].mxu0
      %434 = vmatprep.mubr.f32.mxu0 0.0
      %435 = vmatmul.mubr.f32.gmra.mrb[0].mxu0 %v198
      %v436 = vpop.f32.mrb[0].mxu0
      %v437 = vadd.f32 0.0, %v436
      %v438 = vpop.f32.mrb[0].mxu0
      %439 = vmatprep.mubr.f32.mxu0 0.0
      %440 = vmatmul.mubr.f32.gmra.mrb[0].mxu0 %v199
      %v441 = vpop.f32.mrb[0].mxu0
      %v442 = vadd.f32 0.0, %v441
      %v443 = vpop.f32.mrb[0].mxu0
      %444 = vmatprep.mubr.f32.mxu0 0.0
      %445 = vmatmul.mubr.f32.gmra.mrb[0].mxu0 %v200
      %v446 = vpop.f32.mrb[0].mxu0
      %v447 = vadd.f32 0.0, %v446
      %v448 = vpop.f32.mrb[0].mxu0
      %449 = vmatprep.mubr.f32.mxu0 0.0
      %450 = vmatmul.mubr.f32.gmra.mrb[0].mxu0 %v201
      %v451 = vpop.f32.mrb[0].mxu0
      %v452 = vadd.f32 0.0, %v451
      %v453 = vpop.f32.mrb[0].mxu0
      %454 = vmatprep.mubr.f32.mxu0 0.0
      %455 = vmatmul.mubr.f32.gmra.mrb[0].mxu0 %v202
      %v456 = vpop.f32.mrb[0].mxu0
      %v457 = vadd.f32 0.0, %v456
      %v458 = vpop.f32.mrb[0].mxu0
      %459 = vmatprep.mubr.f32.mxu0 0.0
      %460 = vmatmul.mubr.f32.gmra.mrb[0].mxu0 %v203
      %v461 = vpop.f32.mrb[0].mxu0
      %v462 = vadd.f32 0.0, %v461
      %v463 = vpop.f32.mrb[0].mxu0
      %464 = vmatprep.mubr.f32.mxu0 0.0
      %465 = vmatmul.mubr.f32.gmra.mrb[0].mxu0 %v204
      %v466 = vpop.f32.mrb[0].mxu0
      %v467 = vadd.f32 0.0, %v466
      %v468 = vpop.f32.mrb[0].mxu0
      %469 = vmatprep.mubr.f32.mxu0 0.0
      %470 = vmatmul.mubr.f32.gmra.mrb[0].mxu0 %v205
      %v471 = vpop.f32.mrb[0].mxu0
      %v472 = vadd.f32 0.0, %v471
      %v473 = vpop.f32.mrb[0].mxu0
      %474 = vmatprep.mubr.f32.mxu0 0.0
      %475 = vmatmul.mubr.f32.gmra.mrb[0].mxu0 %v206
      %v476 = vpop.f32.mrb[0].mxu0
      %v477 = vadd.f32 0.0, %v476
      %v478 = vpop.f32.mrb[0].mxu0
      %479 = vmatprep.mubr.f32.mxu0 0.0
      %480 = vmatmul.mubr.f32.gmra.mrb[0].mxu0 %v207
      %v481 = vpop.f32.mrb[0].mxu0
      %v482 = vadd.f32 0.0, %v481
      %v483 = vpop.f32.mrb[0].mxu0
      %484 = vmatprep.mubr.f32.mxu0 0.0
      %485 = vmatmul.mubr.f32.gmra.mrb[0].mxu0 %v208
      %v486 = vpop.f32.mrb[0].mxu0
      %v487 = vadd.f32 0.0, %v486
      %v488 = vpop.f32.mrb[0].mxu0
      %489 = vmatprep.mubr.f32.mxu0 0.0
      %490 = vmatmul.mubr.f32.gmra.mrb[0].mxu0 %v209
      %v491 = vpop.f32.mrb[0].mxu0
      %v492 = vadd.f32 0.0, %v491
      %v493 = vpop.f32.mrb[0].mxu0
      %494 = vmatprep.mubr.f32.mxu0 0.0
      %495 = vmatmul.mubr.f32.gmra.mrb[0].mxu0 %v210
      %v496 = vpop.f32.mrb[0].mxu0
      %v497 = vadd.f32 0.0, %v496
      %v498 = vpop.f32.mrb[0].mxu0
      %499 = vmatprep.mubr.f32.mxu0 0.0
      %500 = vmatmul.mubr.f32.gmra.mrb[0].mxu0 %v211
      %v501 = vpop.f32.mrb[0].mxu0
      %v502 = vadd.f32 0.0, %v501
      %v503 = vpop.f32.mrb[0].mxu0
      %504 = vmatprep.mubr.f32.mxu0 0.0
      %505 = vmatmul.mubr.f32.gmra.mrb[0].mxu0 %v212
      %v506 = vpop.f32.mrb[0].mxu0
      %v507 = vadd.f32 0.0, %v506
      %v508 = vpop.f32.mrb[0].mxu0
      %509 = vmatprep.mubr.f32.mxu0 0.0
      %510 = vmatmul.mubr.f32.gmra.mrb[0].mxu0 %v213
      %v511 = vpop.f32.mrb[0].mxu0
      %v512 = vadd.f32 0.0, %v511
      %v513 = vpop.f32.mrb[0].mxu0
      %514 = vmatprep.mubr.f32.mxu0 0.0
      %515 = vmatmul.mubr.f32.gmra.mrb[0].mxu0 %v214
      %v516 = vpop.f32.mrb[0].mxu0
      %v517 = vadd.f32 0.0, %v516
      %v518 = vpop.f32.mrb[0].mxu0
      %519 = vmatprep.mubr.f32.mxu0 0.0
      %520 = vmatmul.mubr.f32.gmra.mrb[0].mxu0 %v215
      %v521 = vpop.f32.mrb[0].mxu0
      %v522 = vadd.f32 0.0, %v521
      %v523 = vpop.f32.mrb[0].mxu0
      %524 = vmatprep.mubr.f32.mxu0 0.0
      %525 = vmatmul.mubr.f32.gmra.mrb[0].mxu0 %v216
      %v526 = vpop.f32.mrb[0].mxu0
      %v527 = vadd.f32 0.0, %v526
      %v528 = vpop.f32.mrb[0].mxu0
      %529 = vmatprep.mubr.f32.mxu0 0.0
      %530 = vmatmul.mubr.f32.gmra.mrb[0].mxu0 %v217
      %v531 = vpop.f32.mrb[0].mxu0
      %v532 = vadd.f32 0.0, %v531
      %v533 = vpop.f32.mrb[0].mxu0
      %534 = vmatprep.mubr.f32.mxu0 0.0
      %535 = vmatmul.mubr.f32.gmra.mrb[0].mxu0 %v218
      %v536 = vpop.f32.mrb[0].mxu0
      %v537 = vadd.f32 0.0, %v536
      %v538 = vpop.f32.mrb[0].mxu0
      %539 = vmatprep.mubr.f32.mxu0 0.0
      %540 = vmatmul.mubr.f32.gmra.mrb[0].mxu0 %v219
      %v541 = vpop.f32.mrb[0].mxu0
      %v542 = vadd.f32 0.0, %v541
      %v543 = vpop.f32.mrb[0].mxu0
      %544 = vmatprep.mubr.f32.mxu0 0.0
      %545 = vmatmul.mubr.f32.gmra.mrb[0].mxu0 %v220
      %v546 = vpop.f32.mrb[0].mxu0
      %v547 = vadd.f32 0.0, %v546
      %v548 = vpop.f32.mrb[0].mxu0
      %549 = vmatprep.mubr.f32.mxu0 0.0
      %550 = vmatmul.mubr.f32.gmra.mrb[0].mxu0 %v221
      %v551 = vpop.f32.mrb[0].mxu0
      %v552 = vadd.f32 0.0, %v551
      %v553 = vpop.f32.mrb[0].mxu0
      %554 = vmatprep.mubr.f32.mxu0 0.0
      %555 = vmatmul.mubr.f32.gmra.mrb[0].mxu0 %v222
      %v556 = vpop.f32.mrb[0].mxu0
      %v557 = vadd.f32 0.0, %v556
      %v558 = vpop.f32.mrb[0].mxu0
      %559 = vmatprep.mubr.f32.mxu0 0.0
      %560 = vmatmul.mubr.f32.gmra.mrb[0].mxu0 %v223
      %v561 = vpop.f32.mrb[0].mxu0
      %v562 = vadd.f32 0.0, %v561
      %v563 = vpop.f32.mrb[0].mxu0
      %564 = vmatprep.mubr.f32.mxu0 0.0
      %565 = vmatmul.mubr.f32.gmra.mrb[0].mxu0 %v224
      %v566 = vpop.f32.mrb[0].mxu0
      %v567 = vadd.f32 0.0, %v566
      %v568 = vpop.f32.mrb[0].mxu0
      %569 = vmatprep.mubr.f32.mxu0 0.0
      %570 = vmatmul.mubr.f32.gmra.mrb[0].mxu0 %v225
      %v571 = vpop.f32.mrb[0].mxu0
      %v572 = vadd.f32 0.0, %v571
      %v573 = vpop.f32.mrb[0].mxu0
      %574 = vmatprep.mubr.f32.mxu0 0.0
      %575 = vmatmul.mubr.f32.gmra.mrb[0].mxu0 %v226
      %v576 = vpop.f32.mrb[0].mxu0
      %v577 = vadd.f32 0.0, %v576
      %v578 = vpop.f32.mrb[0].mxu0
      %579 = vmatprep.mubr.f32.mxu0 0.0
      %580 = vmatmul.mubr.f32.gmra.mrb[0].mxu0 %v227
      %v581 = vpop.f32.mrb[0].mxu0
      %v582 = vadd.f32 0.0, %v581
      %v583 = vpop.f32.mrb[0].mxu0
      %584 = vmatprep.mubr.f32.mxu0 0.0
      %585 = vmatmul.mubr.f32.gmra.mrb[0].mxu0 %v228
      %v586 = vpop.f32.mrb[0].mxu0
      %v587 = vadd.f32 0.0, %v586
      %v588 = vpop.f32.mrb[0].mxu0
      %589 = vmatprep.mubr.f32.mxu0 0.0
      %590 = vmatmul.mubr.f32.gmra.mrb[0].mxu0 %v229
      %v591 = vpop.f32.mrb[0].mxu0
      %v592 = vadd.f32 0.0, %v591
      %v593 = vpop.f32.mrb[0].mxu0
      %594 = vmatprep.mubr.f32.mxu0 0.0
      %595 = vmatmul.mubr.f32.gmra.mrb[0].mxu0 %v230
      %v596 = vpop.f32.mrb[0].mxu0
      %v597 = vadd.f32 0.0, %v596
      %v598 = vpop.f32.mrb[0].mxu0
      %599 = vmatprep.mubr.f32.mxu0 0.0
      %600 = vmatmul.mubr.f32.gmra.mrb[0].mxu0 %v231
      %v601 = vpop.f32.mrb[0].mxu0
      %v602 = vadd.f32 0.0, %v601
      %v603 = vpop.f32.mrb[0].mxu0
      %604 = vmatprep.mubr.f32.mxu0 0.0
      %605 = vmatmul.mubr.f32.gmra.mrb[0].mxu0 %v232
      %v606 = vpop.f32.mrb[0].mxu0
      %v607 = vadd.f32 0.0, %v606
      %v608 = vpop.f32.mrb[0].mxu0
      %609 = vmatprep.mubr.f32.mxu0 0.0
      %610 = vmatmul.mubr.f32.gmra.mrb[0].mxu0 %v233
      %v611 = vpop.f32.mrb[0].mxu0
      %v612 = vadd.f32 0.0, %v611
      %v613 = vpop.f32.mrb[0].mxu0
      %614 = vmatprep.mubr.f32.mxu0 0.0
      %615 = vmatmul.mubr.f32.gmra.mrb[0].mxu0 %v234
      %v616 = vpop.f32.mrb[0].mxu0
      %v617 = vadd.f32 0.0, %v616
      %v618 = vpop.f32.mrb[0].mxu0
      %619 = vmatprep.mubr.f32.mxu0 0.0
      %620 = vmatmul.mubr.f32.gmra.mrb[0].mxu0 %v235
      %v621 = vpop.f32.mrb[0].mxu0
      %v622 = vadd.f32 0.0, %v621
      %v623 = vpop.f32.mrb[0].mxu0
      %624 = vmatprep.mubr.f32.mxu0 0.0
      %625 = vmatmul.mubr.f32.gmra.mrb[0].mxu0 %v236
      %v626 = vpop.f32.mrb[0].mxu0
      %v627 = vadd.f32 0.0, %v626
      %v628 = vpop.f32.mrb[0].mxu0
      %629 = vmatprep.mubr.f32.mxu0 0.0
      %630 = vmatmul.mubr.f32.gmra.mrb[0].mxu0 %v237
      %v631 = vpop.f32.mrb[0].mxu0
      %v632 = vadd.f32 0.0, %v631
      %v633 = vpop.f32.mrb[0].mxu0
      %634 = vmatprep.mubr.f32.mxu0 0.0
      %635 = vmatmul.mubr.f32.gmra.mrb[0].mxu0 %v238
      %v636 = vpop.f32.mrb[0].mxu0
      %v637 = vadd.f32 0.0, %v636
      %v638 = vpop.f32.mrb[0].mxu0
      %639 = vdwg.mxu0
      %v640 = vsub.f32 %v175, %v322
      %v641 = vsub.f32 %v176, %v327
      %v642 = vsub.f32 %v177, %v332
      %v643 = vsub.f32 %v178, %v337
      %v644 = vsub.f32 %v179, %v342
      %v645 = vsub.f32 %v180, %v347
      %v646 = vsub.f32 %v181, %v352
      %v647 = vsub.f32 %v182, %v357
      %v648 = vsub.f32 %v183, %v362
      %v649 = vsub.f32 %v184, %v367
      %v650 = vsub.f32 %v185, %v372
      %v651 = vsub.f32 %v186, %v377
      %v652 = vsub.f32 %v187, %v382
      %v653 = vsub.f32 %v188, %v387
      %v654 = vsub.f32 %v189, %v392
      %v655 = vsub.f32 %v190, %v397
      %v656 = vsub.f32 %v191, %v402
      %v657 = vsub.f32 %v192, %v407
      %v658 = vsub.f32 %v193, %v412
      %v659 = vsub.f32 %v194, %v417
      %v660 = vsub.f32 %v195, %v422
      %v661 = vsub.f32 %v196, %v427
      %v662 = vsub.f32 %v197, %v432
      %v663 = vsub.f32 %v198, %v437
      %v664 = vsub.f32 %v199, %v442
      %v665 = vsub.f32 %v200, %v447
      %v666 = vsub.f32 %v201, %v452
      %v667 = vsub.f32 %v202, %v457
      %v668 = vsub.f32 %v203, %v462
      %v669 = vsub.f32 %v204, %v467
      %v670 = vsub.f32 %v205, %v472
      %v671 = vsub.f32 %v206, %v477
      %v672 = vsub.f32 %v207, %v482
      %v673 = vsub.f32 %v208, %v487
      %v674 = vsub.f32 %v209, %v492
      %v675 = vsub.f32 %v210, %v497
      %v676 = vsub.f32 %v211, %v502
      %v677 = vsub.f32 %v212, %v507
      %v678 = vsub.f32 %v213, %v512
      %v679 = vsub.f32 %v214, %v517
      %v680 = vsub.f32 %v215, %v522
      %v681 = vsub.f32 %v216, %v527
      %v682 = vsub.f32 %v217, %v532
      %v683 = vsub.f32 %v218, %v537
      %v684 = vsub.f32 %v219, %v542
      %v685 = vsub.f32 %v220, %v547
      %v686 = vsub.f32 %v221, %v552
      %v687 = vsub.f32 %v222, %v557
      %v688 = vsub.f32 %v223, %v562
      %v689 = vsub.f32 %v224, %v567
      %v690 = vsub.f32 %v225, %v572
      %v691 = vsub.f32 %v226, %v577
      %v692 = vsub.f32 %v227, %v582
      %v693 = vsub.f32 %v228, %v587
      %v694 = vsub.f32 %v229, %v592
      %v695 = vsub.f32 %v230, %v597
      %v696 = vsub.f32 %v231, %v602
      %v697 = vsub.f32 %v232, %v607
      %v698 = vsub.f32 %v233, %v612
      %v699 = vsub.f32 %v234, %v617
      %v700 = vsub.f32 %v235, %v622
      %v701 = vsub.f32 %v236, %v627
      %v702 = vsub.f32 %v237, %v632
      %v703 = vsub.f32 %v238, %v637
      %v704 = vmul.f32 %v640, %v640
      %v705 = vmul.f32 %v641, %v641
      %v706 = vmul.f32 %v642, %v642
      %v707 = vmul.f32 %v643, %v643
      %v708 = vmul.f32 %v644, %v644
      %v709 = vmul.f32 %v645, %v645
      %v710 = vmul.f32 %v646, %v646
      %v711 = vmul.f32 %v647, %v647
      %v712 = vmul.f32 %v648, %v648
      %v713 = vmul.f32 %v649, %v649
      %v714 = vmul.f32 %v650, %v650
      %v715 = vmul.f32 %v651, %v651
      %v716 = vmul.f32 %v652, %v652
      %v717 = vmul.f32 %v653, %v653
      %v718 = vmul.f32 %v654, %v654
      %v719 = vmul.f32 %v655, %v655
      %v720 = vmul.f32 %v656, %v656
      %v721 = vmul.f32 %v657, %v657
      %v722 = vmul.f32 %v658, %v658
      %v723 = vmul.f32 %v659, %v659
      %v724 = vmul.f32 %v660, %v660
      %v725 = vmul.f32 %v661, %v661
      %v726 = vmul.f32 %v662, %v662
      %v727 = vmul.f32 %v663, %v663
      %v728 = vmul.f32 %v664, %v664
      %v729 = vmul.f32 %v665, %v665
      %v730 = vmul.f32 %v666, %v666
      %v731 = vmul.f32 %v667, %v667
      %v732 = vmul.f32 %v668, %v668
      %v733 = vmul.f32 %v669, %v669
      %v734 = vmul.f32 %v670, %v670
      %v735 = vmul.f32 %v671, %v671
      %v736 = vmul.f32 %v672, %v672
      %v737 = vmul.f32 %v673, %v673
      %v738 = vmul.f32 %v674, %v674
      %v739 = vmul.f32 %v675, %v675
      %v740 = vmul.f32 %v676, %v676
      %v741 = vmul.f32 %v677, %v677
      %v742 = vmul.f32 %v678, %v678
      %v743 = vmul.f32 %v679, %v679
      %v744 = vmul.f32 %v680, %v680
      %v745 = vmul.f32 %v681, %v681
      %v746 = vmul.f32 %v682, %v682
      %v747 = vmul.f32 %v683, %v683
      %v748 = vmul.f32 %v684, %v684
      %v749 = vmul.f32 %v685, %v685
      %v750 = vmul.f32 %v686, %v686
      %v751 = vmul.f32 %v687, %v687
      %v752 = vmul.f32 %v688, %v688
      %v753 = vmul.f32 %v689, %v689
      %v754 = vmul.f32 %v690, %v690
      %v755 = vmul.f32 %v691, %v691
      %v756 = vmul.f32 %v692, %v692
      %v757 = vmul.f32 %v693, %v693
      %v758 = vmul.f32 %v694, %v694
      %v759 = vmul.f32 %v695, %v695
      %v760 = vmul.f32 %v696, %v696
      %v761 = vmul.f32 %v697, %v697
      %v762 = vmul.f32 %v698, %v698
      %v763 = vmul.f32 %v699, %v699
      %v764 = vmul.f32 %v700, %v700
      %v765 = vmul.f32 %v701, %v701
      %v766 = vmul.f32 %v702, %v702
      %v767 = vmul.f32 %v703, %v703
      %v768 = vld [vmem:[%s169] sm:$0xff]
      %v769 = vadd.f32 %v704, %v705
      %v770 = vadd.f32 %v769, %v706
      %v771 = vadd.f32 %v770, %v707
      %v772 = vadd.f32 %v771, %v708
      %v773 = vadd.f32 %v772, %v709
      %v774 = vadd.f32 %v773, %v710
      %v775 = vadd.f32 %v774, %v711
      %v776 = vadd.f32 %v775, %v712
      %v777 = vadd.f32 %v776, %v713
      %v778 = vadd.f32 %v777, %v714
      %v779 = vadd.f32 %v778, %v715
      %v780 = vadd.f32 %v779, %v716
      %v781 = vadd.f32 %v780, %v717
      %v782 = vadd.f32 %v781, %v718
      %v783 = vadd.f32 %v782, %v719
      %v784 = vadd.f32 %v783, %v720
      %v785 = vadd.f32 %v784, %v721
      %v786 = vadd.f32 %v785, %v722
      %v787 = vadd.f32 %v786, %v723
      %v788 = vadd.f32 %v787, %v724
      %v789 = vadd.f32 %v788, %v725
      %v790 = vadd.f32 %v789, %v726
      %v791 = vadd.f32 %v790, %v727
      %v792 = vadd.f32 %v791, %v728
      %v793 = vadd.f32 %v792, %v729
      %v794 = vadd.f32 %v793, %v730
      %v795 = vadd.f32 %v794, %v731
      %v796 = vadd.f32 %v795, %v732
      %v797 = vadd.f32 %v796, %v733
      %v798 = vadd.f32 %v797, %v734
      %v799 = vadd.f32 %v798, %v735
      %v800 = vadd.f32 %v799, %v736
      %v801 = vadd.f32 %v800, %v737
      %v802 = vadd.f32 %v801, %v738
      %v803 = vadd.f32 %v802, %v739
      %v804 = vadd.f32 %v803, %v740
      %v805 = vadd.f32 %v804, %v741
      %v806 = vadd.f32 %v805, %v742
      %v807 = vadd.f32 %v806, %v743
      %v808 = vadd.f32 %v807, %v744
      %v809 = vadd.f32 %v808, %v745
      %v810 = vadd.f32 %v809, %v746
      %v811 = vadd.f32 %v810, %v747
      %v812 = vadd.f32 %v811, %v748
      %v813 = vadd.f32 %v812, %v749
      %v814 = vadd.f32 %v813, %v750
      %v815 = vadd.f32 %v814, %v751
      %v816 = vadd.f32 %v815, %v752
      %v817 = vadd.f32 %v816, %v753
      %v818 = vadd.f32 %v817, %v754
      %v819 = vadd.f32 %v818, %v755
      %v820 = vadd.f32 %v819, %v756
      %v821 = vadd.f32 %v820, %v757
      %v822 = vadd.f32 %v821, %v758
      %v823 = vadd.f32 %v822, %v759
      %v824 = vadd.f32 %v823, %v760
      %v825 = vadd.f32 %v824, %v761
      %v826 = vadd.f32 %v825, %v762
      %v827 = vadd.f32 %v826, %v763
      %v828 = vadd.f32 %v827, %v764
      %v829 = vadd.f32 %v828, %v765
      %v830 = vadd.f32 %v829, %v766
      %v831 = vadd.f32 %v830, %v767
      %v832 = vadd.f32 %v768, %v831
      %833 = vst [vmem:[%s169] sm:$0xff] %v832
      %p834 = scmp.lt.s32.totalorder %s17, 1
      %s835 = scalar_select %p834, %s17, 1
      %s836 = smul.addr %s835, 8
      %s837 = scalar_lea.vmem %s2, %s836
      // Predicated region
      $region33: #{golem_forward.1} parent=27 // pred_check
        %p838 = pneg %p94
      $region34: #{golem_forward.1} parent=27 // pred_check_branch
        %840 = sbr.rel (%p838) target = $region36
      $region35: #{golem_forward.1} parent=27 // pred_region
        _
      $region36: #{golem_forward.1} parent=27 // pred_fallthru
        _
    $region28: #{golem_forward.1} parent=5 // pred_fallthru
      _
    %p841 = scmp.le.s32.totalorder 2, %s8
    // Predicated region
    $region37: #{golem_forward.1} parent=5 // pred_check
      %p842 = pneg %p841
    $region38: #{golem_forward.1} parent=5 // pred_check_branch
      %844 = sbr.rel (%p842) target = $region40
    $region39: #{golem_forward.1} parent=5 // pred_region
      %s845 = ssub.s32 %s8, 2
      // Predicated region
      $region41: #{golem_forward.1} parent=39 // pred_check
        %p846 = pneg %p100
      $region42: #{golem_forward.1} parent=39 // pred_check_branch
        %848 = sbr.rel (%p846) target = $region44
      $region43: #{golem_forward.1} parent=39 // pred_region
        %p849 = scmp.lt.s32.totalorder %s19, 1
        %s850 = scalar_select %p849, %s19, 1
        %s851 = smul.addr %s850, 8
        %s852 = scalar_lea.vmem %s2, %s851
      $region44: #{golem_forward.1} parent=39 // pred_fallthru
        _
    $region40: #{golem_forward.1} parent=5 // pred_fallthru
      _
  $region6: #{golem_forward.1} parent=0 // loop_footer
    %s12 = sadd.s32 1, %s8
  $region7: #{golem_forward.1} parent=0 // loop_footer_branch
    %7 = sbr.rel target = $region3
  $region8: #{golem_forward.1} parent=0 // loop_exit
    _

// kernel: custom-call.14
$region0: #{custom-call.14}
  %s0 = inlined_call_operand.vmem [shape: f32[16,16], index: 0, kind: input, shape index: {}]
  %s1 = inlined_call_operand.vmem [shape: f32[16,16], index: 1, kind: output, shape index: {0}]
  %s2 = inlined_call_operand.hbm [shape: s32[16], index: 2, kind: output, shape index: {1}]
  %s3 = inlined_call_operand.vmem [shape: s32[16], index: 3, kind: output, shape index: {2}]
  %4 = xla_tuple %s1, %s2, %s3
  $region1: #{custom-call.14} parent=0
    #allocation0 [shape = 'u8[8192]{0}', space=vmem, size = 0x2000, scoped, tag = 'operand span for operand 0']
    #allocation1 [shape = 'u8[8192]{0}', space=vmem, size = 0x2000, scoped, tag = 'operand span for operand 1']
    #allocation2 [shape = 'u8[4096]{0}', space=vmem, size = 0x1000, scoped, tag = 'operand span for operand 2']
    #allocation3 [shape = 'u8[512]{0}', space=vmem, size = 0x400, scoped, tag = 'packed  for operand 2']
    #allocation4 [shape = 's32[1]{0}', space=sflag, size = 0x4, scoped, tag = 'scoped memory for custom-call.14']
    #allocation5 [shape = 'u8[4096]{0}', space=vmem, size = 0x1000, scoped, tag = 'operand span for operand 3']
    #allocation6 [shape = 'u8[512]{0}', space=vmem, size = 0x400, scoped, tag = 'packed  for operand 3']
    #allocation7 [shape = 's32[16,128]{1,0}', space=vmem, size = 0x2000, scoped, tag = 'scratch for permutations']
    %5 = vsyncpa [#allocation4], 0
    %p7 = scmp.gt.s32.totalorder 16, 0
    // Predicated region
    $region2: #{custom-call.14} parent=1 // pred_check
      %p8 = pneg %p7
    $region3: #{custom-call.14} parent=1 // pred_check_branch
      %10 = sbr.rel (%p8) target = $region5
    $region4: #{custom-call.14} parent=1 // pred_region
      %s11 = sshra.s32 16, 3
      %p12 = scmp.gt.s32.totalorder %s11, 0
      // Predicated region
      $region6: #{custom-call.14} parent=4 // pred_check
        %p13 = pneg %p12
      $region7: #{custom-call.14} parent=4 // pred_check_branch
        %15 = sbr.rel (%p13) target = $region9
      $region8: #{custom-call.14} parent=4 // pred_region
        %s16 = ssub.s32 %s11, 1
        %s17 = smul.u32 %s16, 128
        %s18 = sshra.s32 %s17, 4
        %s19 = scalar_lea.vmem %s0, %s18
        %v20 = vld [vmem:[%s0] sm:$0xff]
        // While loop
        $region10: #{custom-call.14} parent=8 // loop_pre_header
          _
        $region11: #{custom-call.14} parent=8 // loop_header
          %s21 = sphi %s0, %s43
          %s22 = sphi [#allocation0], %s44
          %v23 = vphi %v20, %v45
          %s24 = ssub.s32 %s19, 64
          %p25 = scmp.gt.s32.totalorder %s21, %s24
        $region12: #{custom-call.14} parent=8 // loop_header_branch
          %27 = sbr.rel (%p25) target = $region16
        $region13: #{custom-call.14} parent=8 // loop_body
          %28 = vst [vmem:[%s22] sm:$0xff] %v23
          %v29 = vld [vmem:[%s21 + $0x8] sm:$0xff]
          %30 = vst [vmem:[%s22 + $0x8] sm:$0xff] %v29
          %v31 = vld [vmem:[%s21 + $0x10] sm:$0xff]
          %32 = vst [vmem:[%s22 + $0x10] sm:$0xff] %v31
          %v33 = vld [vmem:[%s21 + $0x18] sm:$0xff]
          %34 = vst [vmem:[%s22 + $0x18] sm:$0xff] %v33
          %v35 = vld [vmem:[%s21 + $0x20] sm:$0xff]
          %36 = vst [vmem:[%s22 + $0x20] sm:$0xff] %v35
          %v37 = vld [vmem:[%s21 + $0x28] sm:$0xff]
          %38 = vst [vmem:[%s22 + $0x28] sm:$0xff] %v37
          %v39 = vld [vmem:[%s21 + $0x30] sm:$0xff]
          %40 = vst [vmem:[%s22 + $0x30] sm:$0xff] %v39
          %v41 = vld [vmem:[%s21 + $0x38] sm:$0xff]
          %42 = vst [vmem:[%s22 + $0x38] sm:$0xff] %v41
        $region14: #{custom-call.14} parent=8 // loop_footer
          %s43 = scalar_lea.vmem %s21, 64
          %s44 = scalar_lea.vmem %s22, 64
          %v45 = vld [vmem:[%s21 + $0x40] sm:$0xff]
        $region15: #{custom-call.14} parent=8 // loop_footer_branch
          %46 = sbr.rel target = $region11
        $region16: #{custom-call.14} parent=8 // loop_exit
          _
        // While loop
        $region17: #{custom-call.14} parent=8 // loop_pre_header
          _
        $region18: #{custom-call.14} parent=8 // loop_header
          %s47 = sphi %s21, %s55
          %s48 = sphi %s22, %s56
          %v49 = vphi %v23, %v49
          %p50 = scmp.gt.s32.totalorder %s47, %s19
        $region19: #{custom-call.14} parent=8 // loop_header_branch
          %52 = sbr.rel (%p50) target = $region23
        $region20: #{custom-call.14} parent=8 // loop_body
          %v53 = vld [vmem:[%s47] sm:$0xff]
          %54 = vst [vmem:[%s48] sm:$0xff] %v53
        $region21: #{custom-call.14} parent=8 // loop_footer
          %s55 = scalar_lea.vmem %s47, 8
          %s56 = scalar_lea.vmem %s48, 8
        $region22: #{custom-call.14} parent=8 // loop_footer_branch
          %57 = sbr.rel target = $region18
        $region23: #{custom-call.14} parent=8 // loop_exit
          _
      $region9: #{custom-call.14} parent=4 // pred_fallthru
        _
      %s58 = sand.u32 16, 7
      %s59 = sshllo.u32 0, %s58
      %s60 = smul.u32 %s11, 128
      %s61 = sshra.s32 %s60, 4
      %s62 = scalar_lea.vmem [#allocation0], %s61
      %s63 = smul.u32 %s11, 128
      %s64 = sshra.s32 %s63, 4
      %s65 = scalar_lea.vmem %s0, %s64
      %v66 = vld [vmem:[%s65] sm:%s59]
      %67 = vst [vmem:[%s62] sm:%s59] %v66
    $region5: #{custom-call.14} parent=1 // pred_fallthru
      _
    %v68 = vld [vmem:[#allocation0] sm:$0xff]
    %69 = vst [vmem:[#allocation1] sm:$0xff] %v68
    %s70 = scalar_lea.vmem [#allocation1], 8
    %s71 = scalar_lea.vmem [#allocation0], 8
    %v72 = vld [vmem:[%s71] sm:$0xff]
    %73 = vst [vmem:[%s70] sm:$0xff] %v72
    %74 = vst [vmem:[#allocation2] sm:$0x1] 0
    %v75 = vlaneseq
    %v76 = vshrl.u32 %v75, 7
    %v77 = vmov %v76
    loop: start=0, step=1, limit=2
    $region24: #{custom-call.14} parent=1 // loop_pre_header
      _
    $region25: #{custom-call.14} parent=1 // loop_header
      %s79 = sphi 0, %s83
      %p80 = scmp.ge.s32.totalorder %s79, 2
    $region26: #{custom-call.14} parent=1 // loop_header_branch
      %82 = sbr.rel (%p80) target = $region30
    $region27: #{custom-call.14} parent=1 // loop_body
      %s84 = smul.addr %s79, 8
      %s85 = scalar_lea.vmem [#allocation7], %s84
      %s86 = smul.u32 %s79, 8
      %v87 = vstv %s86
      %v88 = vadd.s32 %v77, %v87
      %89 = vst [vmem:[%s85] sm:$0xff] %v88
    $region28: #{custom-call.14} parent=1 // loop_footer
      %s83 = sadd.s32 1, %s79
    $region29: #{custom-call.14} parent=1 // loop_footer_branch
      %78 = sbr.rel target = $region25
    $region30: #{custom-call.14} parent=1 // loop_exit
      _
    loop: start=0, step=1, limit=16
    $region31: #{custom-call.14} parent=1 // loop_pre_header
      _
    $region32: #{custom-call.14} parent=1 // loop_header
      %s91 = sphi 0, %s95
      %p92 = scmp.ge.s32.totalorder %s91, 16
    $region33: #{custom-call.14} parent=1 // loop_header_branch
      %94 = sbr.rel (%p92) target = $region37
    $region34: #{custom-call.14} parent=1 // loop_body
      %v96 = vstv %s91
      %v97 = vlaneseq
      %v98 = vshrl.u32 %v97, 7
      %v99 = vmov %v98
      %v100 = vld [vmem:[#allocation1] sm:$0xff]
      %v101 = vand.u32 2147483647, %v100
      %v103 = vstv %s91
      %vm104 = vcmp.ge.s32.totalorder %v99, %v103
      %vm105 = vcmp.lt.s32.totalorder %v99, 16
      %vm106 = vmand %vm104, %vm105
      %vm107 = vcmp.lt.f32.partialorder -inf, %v101
      %vm108 = vmand %vm106, %vm107
      %v109 = vsel %vm108, %v99, %v96
      %v110 = vsel %vm108, %v101, -inf
      %s111 = scalar_lea.vmem [#allocation1], 8
      %v112 = vld [vmem:[%s111] sm:$0xff]
      %v113 = vand.u32 2147483647, %v112
      %v114 = vadd.s32 %v99, 8
      %v115 = vstv %s91
      %vm116 = vcmp.ge.s32.totalorder %v114, %v115
      %vm117 = vcmp.lt.s32.totalorder %v114, 16
      %vm118 = vmand %vm116, %vm117
      %vm119 = vcmp.lt.f32.partialorder %v110, %v113
      %vm120 = vmand %vm118, %vm119
      %v121 = vsel %vm120, %v114, %v109
      %v122 = vsel %vm120, %v113, %v110
      %v123 = vrot.slane %v122, 1
      %v124 = vrot.slane %v121, 1
      %vm125 = vcmp.ge.f32.partialorder %v123, %v122
      %v126 = vsel %vm125, %v123, %v122
      %v127 = vsel %vm125, %v124, %v121
      %v128 = vrot.slane %v123, 1
      %v129 = vrot.slane %v124, 1
      %vm130 = vcmp.ge.f32.partialorder %v128, %v126
      %v131 = vsel %vm130, %v128, %v126
      %v132 = vsel %vm130, %v129, %v127
      %v133 = vrot.slane %v128, 1
      %v134 = vrot.slane %v129, 1
      %vm135 = vcmp.ge.f32.partialorder %v133, %v131
      %v136 = vsel %vm135, %v133, %v131
      %v137 = vsel %vm135, %v134, %v132
      %v138 = vrot.slane %v133, 1
      %v139 = vrot.slane %v134, 1
      %vm140 = vcmp.ge.f32.partialorder %v138, %v136
      %v141 = vsel %vm140, %v138, %v136
      %v142 = vsel %vm140, %v139, %v137
      %v143 = vrot.slane %v138, 1
      %v144 = vrot.slane %v139, 1
      %vm145 = vcmp.ge.f32.partialorder %v143, %v141
      %v146 = vsel %vm145, %v143, %v141
      %v147 = vsel %vm145, %v144, %v142
      %v148 = vrot.slane %v143, 1
      %v149 = vrot.slane %v144, 1
      %vm150 = vcmp.ge.f32.partialorder %v148, %v146
      %v151 = vsel %vm150, %v148, %v146
      %v152 = vsel %vm150, %v149, %v147
      %v153 = vrot.slane %v148, 1
      %v154 = vrot.slane %v149, 1
      %vm155 = vcmp.ge.f32.partialorder %v153, %v151
      %v156 = vsel %vm155, %v153, %v151
      %v157 = vsel %vm155, %v154, %v152
      %s158 = ssub.s32 128, %s91
      %159 = vrot.lane.b32.xlu0 %v157, %s158
      %v160 = vpop.permute.xlu0 %159
      %s161 = vtos %v160
      %v162 = vstv %s91
      %v163 = vlaneseq
      %v164 = vand.u32 %v163, 127
      %vm165 = vcmp.eq.s32.totalorder %v164, %v162
      %v166 = vstv %s161
      %v167 = vld [vmem:[#allocation2] ss:$0 sm:$0xff]
      %v168 = vsel %vm165, %v166, %v167
      %169 = vst [vmem:[#allocation2] sm:$0x1] %v168
      %s170 = scalar_lea.vmem [#allocation1], %s91
      %s171 = scalar_lea.vmem [#allocation1], %s161
      %v172 = vld [vmem:[%s170] ss:$0 sm:$0xff]
      %v173 = vld [vmem:[%s171] ss:$0 sm:$0xff]
      %174 = vst [vmem:[%s171] sm:$0x1] %v172
      %175 = vst [vmem:[%s170] sm:$0x1] %v173
      %s176 = scalar_lea.vmem [#allocation7], %s91
      %s177 = scalar_lea.vmem [#allocation7], %s161
      %v178 = vld [vmem:[%s176] ss:$0 sm:$0xff]
      %v179 = vld [vmem:[%s177] ss:$0 sm:$0xff]
      %180 = vst [vmem:[%s177] sm:$0x1] %v178
      %181 = vst [vmem:[%s176] sm:$0x1] %v179
      %vm182 = vcmp.ne.f32.partialorder %v173, 0.0
      %vm183 = vmand %vm165, %vm182
      %v184 = vsel %vm183, %v173, 1.0
      %v185 = vlaneseq
      %v186 = vand.u32 %v185, 127
      %v187 = vstv %s91
      %vm188 = vcmp.gt.s32.totalorder %v186, %v187
      %v189 = vsel %vm188, %v173, 0.0
      %v190 = vlaneseq
      %v191 = vshrl.u32 %v190, 7
      %v192 = vmov %v191
      %v193 = vld [vmem:[#allocation1] sm:$0xff]
      %v195 = vstv %s91
      %vm196 = vcmp.gt.s32.totalorder %v192, %v195
      %v197 = vsel %vm196, %v184, 1.0
      %v198 = vrcp.pop %v197
      %v199 = vmul.f32 %v193, %v198
      %vm200 = vmand %vm196, %vm165
      %v201 = vsel %vm200, %v199, 0.0
      %202 = vadd.xlane.f32.xlu0 %v201
      %v203 = vpop.xlane.xlu0 %202
      %v204 = vmul.f32 %v203, %v189
      %v205 = vsub.f32 %v199, %v204
      %206 = vst [vmem:[#allocation1] sm:$0xff] %v205
      %s207 = scalar_lea.vmem [#allocation1], 8
      %v208 = vld [vmem:[%s207] sm:$0xff]
      %v209 = vadd.s32 %v192, 8
      %v210 = vstv %s91
      %vm211 = vcmp.gt.s32.totalorder %v209, %v210
      %v212 = vsel %vm211, %v184, 1.0
      %v213 = vrcp.pop %v212
      %v214 = vmul.f32 %v208, %v213
      %vm215 = vmand %vm211, %vm165
      %v216 = vsel %vm215, %v214, 0.0
      %217 = vadd.xlane.f32.xlu0 %v216
      %v218 = vpop.xlane.xlu0 %217
      %v219 = vmul.f32 %v218, %v189
      %v220 = vsub.f32 %v214, %v219
      %221 = vst [vmem:[%s207] sm:$0xff] %v220
    $region35: #{custom-call.14} parent=1 // loop_footer
      %s95 = sadd.s32 1, %s91
    $region36: #{custom-call.14} parent=1 // loop_footer_branch
      %90 = sbr.rel target = $region32
    $region37: #{custom-call.14} parent=1 // loop_exit
      _
    %v222 = vld [vmem:[#allocation7] sm:$0xff]
    %s223 = scalar_lea.vmem [#allocation7], 8
    %v224 = vld [vmem:[%s223] sm:$0xff]
    %s225 = scalar_lea.vmem [#allocation7], 16
    %s226 = scalar_lea.vmem [#allocation7], 24
    %s227 = scalar_lea.vmem [#allocation7], 32
    %s228 = scalar_lea.vmem [#allocation7], 40
    %s229 = scalar_lea.vmem [#allocation7], 48
    %s230 = scalar_lea.vmem [#allocation7], 56
    %s231 = scalar_lea.vmem [#allocation7], 64
    %s232 = scalar_lea.vmem [#allocation7], 72
    %s233 = scalar_lea.vmem [#allocation7], 80
    %s234 = scalar_lea.vmem [#allocation7], 88
    %s235 = scalar_lea.vmem [#allocation7], 96
    %s236 = scalar_lea.vmem [#allocation7], 104
    %s237 = scalar_lea.vmem [#allocation7], 112
    %s238 = scalar_lea.vmem [#allocation7], 120
    %239 = vxpose.xlu0.b32.start [1/16] %v222, 128
    %240 = vxpose.xlu0.b32.cont [2/16] %v224, 128
    %241 = vxpose.xlu0.b32.cont [3/16] 0, 128
    %242 = vxpose.xlu0.b32.cont [4/16] 0, 128
    %243 = vxpose.xlu0.b32.cont [5/16] 0, 128
    %244 = vxpose.xlu0.b32.cont [6/16] 0, 128
    %245 = vxpose.xlu0.b32.cont [7/16] 0, 128
    %246 = vxpose.xlu0.b32.cont [8/16] 0, 128
    %247 = vxpose.xlu0.b32.cont [9/16] 0, 128
    %248 = vxpose.xlu0.b32.cont [10/16] 0, 128
    %249 = vxpose.xlu0.b32.cont [11/16] 0, 128
    %250 = vxpose.xlu0.b32.cont [12/16] 0, 128
    %251 = vxpose.xlu0.b32.cont [13/16] 0, 128
    %252 = vxpose.xlu0.b32.cont [14/16] 0, 128
    %253 = vxpose.xlu0.b32.cont [15/16] 0, 128
    %254 = vxpose.xlu0.b32.end [16/16] 0, 128
    %v255 = vpop.trf.xlu0
    %v256 = vpop.trf.xlu0
    %v257 = vpop.trf.xlu0
    %v258 = vpop.trf.xlu0
    %v259 = vpop.trf.xlu0
    %v260 = vpop.trf.xlu0
    %v261 = vpop.trf.xlu0
    %v262 = vpop.trf.xlu0
    %v263 = vpop.trf.xlu0
    %v264 = vpop.trf.xlu0
    %v265 = vpop.trf.xlu0
    %v266 = vpop.trf.xlu0
    %v267 = vpop.trf.xlu0
    %v268 = vpop.trf.xlu0
    %v269 = vpop.trf.xlu0
    %v270 = vpop.trf.xlu0
    %271 = vst [vmem:[#allocation5] sm:$0x1] %v255
    %s273 = sshllo.u32 0, 1
    %v275 = vld [vmem:[#allocation2] sm:%s273]
    %s276 = sshllo.u32 0, 1
    %277 = vst [vmem:[#allocation3] sm:%s276] %v275
    %s279 = sshllo.u32 0, 1
    %v281 = vld [vmem:[#allocation5] sm:%s279]
    %s282 = sshllo.u32 0, 1
    %283 = vst [vmem:[#allocation6] sm:%s282] %v281
    %p285 = scmp.gt.s32.totalorder 16, 0
    // Predicated region
    $region38: #{custom-call.14} parent=1 // pred_check
      %p286 = pneg %p285
    $region39: #{custom-call.14} parent=1 // pred_check_branch
      %288 = sbr.rel (%p286) target = $region41
    $region40: #{custom-call.14} parent=1 // pred_region
      %s289 = sshra.s32 16, 3
      %p290 = scmp.gt.s32.totalorder %s289, 0
      // Predicated region
      $region42: #{custom-call.14} parent=40 // pred_check
        %p291 = pneg %p290
      $region43: #{custom-call.14} parent=40 // pred_check_branch
        %293 = sbr.rel (%p291) target = $region45
      $region44: #{custom-call.14} parent=40 // pred_region
        %s294 = ssub.s32 %s289, 1
        %s295 = smul.u32 %s294, 128
        %s296 = sshra.s32 %s295, 4
        %s297 = scalar_lea.vmem [#allocation1], %s296
        %v298 = vld [vmem:[#allocation1] sm:$0xff]
        // While loop
        $region46: #{custom-call.14} parent=44 // loop_pre_header
          _
        $region47: #{custom-call.14} parent=44 // loop_header
          %s299 = sphi [#allocation1], %s321
          %s300 = sphi %s1, %s322
          %v301 = vphi %v298, %v323
          %s302 = ssub.s32 %s297, 64
          %p303 = scmp.gt.s32.totalorder %s299, %s302
        $region48: #{custom-call.14} parent=44 // loop_header_branch
          %305 = sbr.rel (%p303) target = $region52
        $region49: #{custom-call.14} parent=44 // loop_body
          %306 = vst [vmem:[%s300] sm:$0xff] %v301
          %v307 = vld [vmem:[%s299 + $0x8] sm:$0xff]
          %308 = vst [vmem:[%s300 + $0x8] sm:$0xff] %v307
          %v309 = vld [vmem:[%s299 + $0x10] sm:$0xff]
          %310 = vst [vmem:[%s300 + $0x10] sm:$0xff] %v309
          %v311 = vld [vmem:[%s299 + $0x18] sm:$0xff]
          %312 = vst [vmem:[%s300 + $0x18] sm:$0xff] %v311
          %v313 = vld [vmem:[%s299 + $0x20] sm:$0xff]
          %314 = vst [vmem:[%s300 + $0x20] sm:$0xff] %v313
          %v315 = vld [vmem:[%s299 + $0x28] sm:$0xff]
          %316 = vst [vmem:[%s300 + $0x28] sm:$0xff] %v315
          %v317 = vld [vmem:[%s299 + $0x30] sm:$0xff]
          %318 = vst [vmem:[%s300 + $0x30] sm:$0xff] %v317
          %v319 = vld [vmem:[%s299 + $0x38] sm:$0xff]
          %320 = vst [vmem:[%s300 + $0x38] sm:$0xff] %v319
        $region50: #{custom-call.14} parent=44 // loop_footer
          %s321 = scalar_lea.vmem %s299, 64
          %s322 = scalar_lea.vmem %s300, 64
          %v323 = vld [vmem:[%s299 + $0x40] sm:$0xff]
        $region51: #{custom-call.14} parent=44 // loop_footer_branch
          %324 = sbr.rel target = $region47
        $region52: #{custom-call.14} parent=44 // loop_exit
          _
        // While loop
        $region53: #{custom-call.14} parent=44 // loop_pre_header
          _
        $region54: #{custom-call.14} parent=44 // loop_header
          %s325 = sphi %s299, %s333
          %s326 = sphi %s300, %s334
          %v327 = vphi %v301, %v327
          %p328 = scmp.gt.s32.totalorder %s325, %s297
        $region55: #{custom-call.14} parent=44 // loop_header_branch
          %330 = sbr.rel (%p328) target = $region59
        $region56: #{custom-call.14} parent=44 // loop_body
          %v331 = vld [vmem:[%s325] sm:$0xff]
          %332 = vst [vmem:[%s326] sm:$0xff] %v331
        $region57: #{custom-call.14} parent=44 // loop_footer
          %s333 = scalar_lea.vmem %s325, 8
          %s334 = scalar_lea.vmem %s326, 8
        $region58: #{custom-call.14} parent=44 // loop_footer_branch
          %335 = sbr.rel target = $region54
        $region59: #{custom-call.14} parent=44 // loop_exit
          _
      $region45: #{custom-call.14} parent=40 // pred_fallthru
        _
      %s336 = sand.u32 16, 7
      %s337 = sshllo.u32 0, %s336
      %s338 = smul.u32 %s289, 128
      %s339 = sshra.s32 %s338, 4
      %s340 = scalar_lea.vmem %s1, %s339
      %s341 = smul.u32 %s289, 128
      %s342 = sshra.s32 %s341, 4
      %s343 = scalar_lea.vmem [#allocation1], %s342
      %v344 = vld [vmem:[%s343] sm:%s337]
      %345 = vst [vmem:[%s340] sm:%s337] %v344
    $region41: #{custom-call.14} parent=1 // pred_fallthru
      _
    // Predicated region
    $region60: #{custom-call.14} parent=1 // pred_check
      _
    $region61: #{custom-call.14} parent=1 // pred_check_branch
      %347 = sbr.rel (0) target = $region63
    $region62: #{custom-call.14} parent=1 // pred_region
      %s349 = ssub.s32 16, 16
      %350 = vsyncadd [#allocation4], %s349
      %s351 = sshll.u32 [#allocation3], 4
      %s352 = int_to_ptr.vmem [resolvable:$true] %s351
      %354 = dma.vmem_to_hbm [thread:$0]  %s352, 16, %s2, [#allocation4]
    $region63: #{custom-call.14} parent=1 // pred_fallthru
      _
    // Predicated region
    $region64: #{custom-call.14} parent=1 // pred_check
      _
    $region65: #{custom-call.14} parent=1 // pred_check_branch
      %356 = sbr.rel (0) target = $region67
    $region66: #{custom-call.14} parent=1 // pred_region
      %p358 = scmp.gt.s32.totalorder 1, 0
      // Predicated region
      $region68: #{custom-call.14} parent=66 // pred_check
        %p359 = pneg %p358
      $region69: #{custom-call.14} parent=66 // pred_check_branch
        %361 = sbr.rel (%p359) target = $region71
      $region70: #{custom-call.14} parent=66 // pred_region
        %s362 = sshra.s32 1, 3
        %p363 = scmp.gt.s32.totalorder %s362, 0
        // Predicated region
        $region72: #{custom-call.14} parent=70 // pred_check
          %p364 = pneg %p363
        $region73: #{custom-call.14} parent=70 // pred_check_branch
          %366 = sbr.rel (%p364) target = $region75
        $region74: #{custom-call.14} parent=70 // pred_region
          %s367 = ssub.s32 %s362, 1
          %s368 = smul.u32 %s367, 128
          %s369 = sshra.s32 %s368, 4
          %s370 = scalar_lea.vmem [#allocation6], %s369
          %v371 = vld [vmem:[#allocation6] sm:$0xff]
          // While loop
          $region76: #{custom-call.14} parent=74 // loop_pre_header
            _
          $region77: #{custom-call.14} parent=74 // loop_header
            %s372 = sphi [#allocation6], %s394
            %s373 = sphi %s3, %s395
            %v374 = vphi %v371, %v396
            %s375 = ssub.s32 %s370, 64
            %p376 = scmp.gt.s32.totalorder %s372, %s375
          $region78: #{custom-call.14} parent=74 // loop_header_branch
            %378 = sbr.rel (%p376) target = $region82
          $region79: #{custom-call.14} parent=74 // loop_body
            %379 = vst [vmem:[%s373] sm:$0xff] %v374
            %v380 = vld [vmem:[%s372 + $0x8] sm:$0xff]
            %381 = vst [vmem:[%s373 + $0x8] sm:$0xff] %v380
            %v382 = vld [vmem:[%s372 + $0x10] sm:$0xff]
            %383 = vst [vmem:[%s373 + $0x10] sm:$0xff] %v382
            %v384 = vld [vmem:[%s372 + $0x18] sm:$0xff]
            %385 = vst [vmem:[%s373 + $0x18] sm:$0xff] %v384
            %v386 = vld [vmem:[%s372 + $0x20] sm:$0xff]
            %387 = vst [vmem:[%s373 + $0x20] sm:$0xff] %v386
            %v388 = vld [vmem:[%s372 + $0x28] sm:$0xff]
            %389 = vst [vmem:[%s373 + $0x28] sm:$0xff] %v388
            %v390 = vld [vmem:[%s372 + $0x30] sm:$0xff]
            %391 = vst [vmem:[%s373 + $0x30] sm:$0xff] %v390
            %v392 = vld [vmem:[%s372 + $0x38] sm:$0xff]
            %393 = vst [vmem:[%s373 + $0x38] sm:$0xff] %v392
          $region80: #{custom-call.14} parent=74 // loop_footer
            %s394 = scalar_lea.vmem %s372, 64
            %s395 = scalar_lea.vmem %s373, 64
            %v396 = vld [vmem:[%s372 + $0x40] sm:$0xff]
          $region81: #{custom-call.14} parent=74 // loop_footer_branch
            %397 = sbr.rel target = $region77
          $region82: #{custom-call.14} parent=74 // loop_exit
            _
          // While loop
          $region83: #{custom-call.14} parent=74 // loop_pre_header
            _
          $region84: #{custom-call.14} parent=74 // loop_header
            %s398 = sphi %s372, %s406
            %s399 = sphi %s373, %s407
            %v400 = vphi %v374, %v400
            %p401 = scmp.gt.s32.totalorder %s398, %s370
          $region85: #{custom-call.14} parent=74 // loop_header_branch
            %403 = sbr.rel (%p401) target = $region89
          $region86: #{custom-call.14} parent=74 // loop_body
            %v404 = vld [vmem:[%s398] sm:$0xff]
            %405 = vst [vmem:[%s399] sm:$0xff] %v404
          $region87: #{custom-call.14} parent=74 // loop_footer
            %s406 = scalar_lea.vmem %s398, 8
            %s407 = scalar_lea.vmem %s399, 8
          $region88: #{custom-call.14} parent=74 // loop_footer_branch
            %408 = sbr.rel target = $region84
          $region89: #{custom-call.14} parent=74 // loop_exit
            _
        $region75: #{custom-call.14} parent=70 // pred_fallthru
          _
        %s409 = sand.u32 1, 7
        %s410 = sshllo.u32 0, %s409
        %s411 = smul.u32 %s362, 128
        %s412 = sshra.s32 %s411, 4
        %s413 = scalar_lea.vmem %s3, %s412
        %s414 = smul.u32 %s362, 128
        %s415 = sshra.s32 %s414, 4
        %s416 = scalar_lea.vmem [#allocation6], %s415
        %v417 = vld [vmem:[%s416] sm:%s410]
        %418 = vst [vmem:[%s413] sm:%s410] %v417
      $region71: #{custom-call.14} parent=66 // pred_fallthru
        _
    $region67: #{custom-call.14} parent=1 // pred_fallthru
      _
    // Predicated region
    $region90: #{custom-call.14} parent=1 // pred_check
      _
    $region91: #{custom-call.14} parent=1 // pred_check_branch
      %420 = sbr.rel (0) target = $region93
    $region92: #{custom-call.14} parent=1 // pred_region
      %421 = dma.done [#allocation4], 16
    $region93: #{custom-call.14} parent=1 // pred_fallthru
      _
    // Predicated region
    $region94: #{custom-call.14} parent=1 // pred_check
      _
    $region95: #{custom-call.14} parent=1 // pred_check_branch
      %423 = sbr.rel (0) target = $region97
    $region96: #{custom-call.14} parent=1 // pred_region
      _
    $region97: #{custom-call.14} parent=1 // pred_fallthru
      _
    %424 = vsyncpa [#allocation4], 1

// kernel: custom-call.10
$region0: #{custom-call.10}
  %s0 = inlined_call_operand.vmem [shape: f32[1,16,16], index: 0, kind: input, shape index: {}]
  %s1 = inlined_call_operand.vmem [shape: f32[1,16,16], index: 1, kind: output, shape index: {}]
  $region1: #{custom-call.10} parent=0
    #allocation0 [shape = 'u8[8192]{0}', space=vmem, size = 0x2000, scoped, tag = 'operand span for operand 0']
    #allocation1 [shape = 'u8[8192]{0}', space=vmem, size = 0x2000, scoped, tag = 'operand span for operand 1']
    #allocation2 [shape = 'f32[16,16]{1,0}', space=vmem, size = 0x2000, scoped, tag = 'rescaled input a']
    // Predicated region
    $region2: #{custom-call.10} parent=1 // pred_check
      _
    $region3: #{custom-call.10} parent=1 // pred_check_branch
      %3 = sbr.rel (0) target = $region5
    $region4: #{custom-call.10} parent=1 // pred_region
      // Predicated region
      $region6: #{custom-call.10} parent=4 // pred_check
        _
      $region7: #{custom-call.10} parent=4 // pred_check_branch
        %5 = sbr.rel (0) target = $region9
      $region8: #{custom-call.10} parent=4 // pred_region
        // Predicated region
        $region21: #{custom-call.10} parent=8 // pred_check
          _
        $region22: #{custom-call.10} parent=8 // pred_check_branch
          %22 = sbr.rel (0) target = $region24
        $region23: #{custom-call.10} parent=8 // pred_region
          loop: start=0, step=1, limit=1
          $region25: #{custom-call.10} parent=23 // loop_pre_header
            _
          $region26: #{custom-call.10} parent=23 // loop_header
            %s24 = sphi 0, %s28
            %p25 = scmp.ge.s32.totalorder %s24, 1
            %s29 = sphi %s0, %s0
            %s30 = sphi [#allocation0], [#allocation0]
          $region27: #{custom-call.10} parent=23 // loop_header_branch
            %27 = sbr.rel (%p25) target = $region31
          $region28: #{custom-call.10} parent=23 // loop_body
            %v31 = vld [vmem:[%s29] sm:$0xff]
            %32 = vst [vmem:[%s30] sm:$0xff] %v31
            %v33 = vld [vmem:[%s29 + $0x8] sm:$0xff]
            %34 = vst [vmem:[%s30 + $0x8] sm:$0xff] %v33
          $region29: #{custom-call.10} parent=23 // loop_footer
            %s28 = sadd.s32 1, %s24
          $region30: #{custom-call.10} parent=23 // loop_footer_branch
            %23 = sbr.rel target = $region26
          $region31: #{custom-call.10} parent=23 // loop_exit
            _
        $region24: #{custom-call.10} parent=8 // pred_fallthru
          _
        // Predicated region
        $region32: #{custom-call.10} parent=8 // pred_check
          _
        $region33: #{custom-call.10} parent=8 // pred_check_branch
          %36 = sbr.rel target = $region35
        $region34: #{custom-call.10} parent=8 // pred_region
          _
        $region35: #{custom-call.10} parent=8 // pred_fallthru
          _
      $region9: #{custom-call.10} parent=4 // pred_fallthru
        _
      // Predicated region
      $region10: #{custom-call.10} parent=4 // pred_check
        _
      $region11: #{custom-call.10} parent=4 // pred_check_branch
        %7 = sbr.rel target = $region13
      $region12: #{custom-call.10} parent=4 // pred_region
        loop: start=0, step=1, limit=1
        $region14: #{custom-call.10} parent=12 // loop_pre_header
          _
        $region15: #{custom-call.10} parent=12 // loop_header
          %s10 = sphi 0, %s14
          %p11 = scmp.ge.s32.totalorder %s10, 1
          %s15 = sphi %s0, %s0
          %s16 = sphi [#allocation0], [#allocation0]
        $region16: #{custom-call.10} parent=12 // loop_header_branch
          %13 = sbr.rel (%p11) target = $region20
        $region17: #{custom-call.10} parent=12 // loop_body
          %v17 = vld [vmem:[%s15] sm:$0xff]
          %18 = vst [vmem:[%s16] sm:$0xff] %v17
          %v19 = vld [vmem:[%s15 + $0x8] sm:$0xff]
          %20 = vst [vmem:[%s16 + $0x8] sm:$0xff] %v19
        $region18: #{custom-call.10} parent=12 // loop_footer
          %s14 = sadd.s32 1, %s10
        $region19: #{custom-call.10} parent=12 // loop_footer_branch
          %9 = sbr.rel target = $region15
        $region20: #{custom-call.10} parent=12 // loop_exit
          _
      $region13: #{custom-call.10} parent=4 // pred_fallthru
        _
    $region5: #{custom-call.10} parent=1 // pred_fallthru
      _
    %37 = vnop
    %v38 = vlaneseq
    %v39 = vand.u32 %v38, 127
    %vm40 = vcmp.lt.s32.totalorder %v39, 16
    %v41 = vlaneseq
    %v42 = vshrl.u32 %v41, 7
    %vm44 = vcmp.eq.s32.totalorder %v42, %v39
    %v45 = vld [vmem:[#allocation0] sm:$0xff]
    %v46 = vsel %vm44, %v45, 0.0
    %47 = vadd.xlane.f32.xlu0 %v46
    %v48 = vpop.xlane.xlu0 %47
    %vm49 = vcmp.ge.s32.totalorder %v42, %v39
    %vm50 = vmand %vm49, %vm40
    %v51 = vsel %vm50, %v45, 0.0
    %v52 = vrcp.pop %v48
    %v53 = vmul.f32 %v51, %v52
    %54 = vst [vmem:[#allocation2] sm:$0xff] %v53
    %s55 = scalar_lea.vmem [#allocation0], 8
    %s56 = scalar_lea.vmem [#allocation2], 8
    %v57 = vlaneseq
    %v58 = vshrl.u32 %v57, 7
    %v59 = vadd.s32 %v58, 8
    %vm60 = vcmp.eq.s32.totalorder %v59, %v39
    %v61 = vld [vmem:[%s55] sm:$0xff]
    %v62 = vsel %vm60, %v61, 0.0
    %63 = vadd.xlane.f32.xlu0 %v62
    %v64 = vpop.xlane.xlu0 %63
    %vm65 = vcmp.ge.s32.totalorder %v59, %v39
    %vm66 = vmand %vm65, %vm40
    %v67 = vsel %vm66, %v61, 0.0
    %v68 = vrcp.pop %v64
    %v69 = vmul.f32 %v67, %v68
    %70 = vst [vmem:[%s56] sm:$0xff] %v69
    %v71 = vlaneseq
    %v72 = vand.u32 %v71, 127
    %v73 = vlaneseq
    %v74 = vshrl.u32 %v73, 7
    %vm76 = vcmp.eq.s32.totalorder %v72, %v74
    %v77 = vlaneseq
    %v78 = vand.u32 %v77, 127
    %vm79 = vcmp.eq.s32.totalorder %v78, 0
    %v80 = vsel %vm79, 1.0, -1.0
    %v81 = vsel %vm76, %v80, 0.0
    %v82 = vlaneseq
    %v83 = vand.u32 %v82, 127
    %v84 = vlaneseq
    %v85 = vshrl.u32 %v84, 7
    %v86 = vadd.s32 %v85, 8
    %vm87 = vcmp.eq.s32.totalorder %v83, %v86
    %v88 = vsel %vm87, -1.0, 0.0
    %s89 = scalar_lea.vmem [#allocation2], 1
    %v90 = vld [vmem:[%s89] ss:$0 sm:$0xff]
    %v91 = vxor.u32 %v90, 2147483648
    %v92 = vlaneseq
    %v93 = vand.u32 %v92, 127
    %vm94 = vcmp.eq.s32.totalorder %v93, 1
    %v95 = vmul.f32 %v91, %v81
    %96 = vadd.xlane.f32.xlu0 %v95
    %v97 = vpop.xlane.xlu0 %96
    %v98 = vsel %vm94, %v97, %v81
    %s99 = scalar_lea.vmem [#allocation2], 2
    %v100 = vld [vmem:[%s99] ss:$0 sm:$0xff]
    %v101 = vxor.u32 %v100, 2147483648
    %v102 = vlaneseq
    %v103 = vand.u32 %v102, 127
    %vm104 = vcmp.eq.s32.totalorder %v103, 2
    %v105 = vmul.f32 %v101, %v98
    %106 = vadd.xlane.f32.xlu0 %v105
    %v107 = vpop.xlane.xlu0 %106
    %v108 = vsel %vm104, %v107, %v98
    %s109 = scalar_lea.vmem [#allocation2], 3
    %v110 = vld [vmem:[%s109] ss:$0 sm:$0xff]
    %v111 = vxor.u32 %v110, 2147483648
    %v112 = vlaneseq
    %v113 = vand.u32 %v112, 127
    %vm114 = vcmp.eq.s32.totalorder %v113, 3
    %v115 = vmul.f32 %v111, %v108
    %116 = vadd.xlane.f32.xlu0 %v115
    %v117 = vpop.xlane.xlu0 %116
    %v118 = vsel %vm114, %v117, %v108
    %s119 = scalar_lea.vmem [#allocation2], 4
    %v120 = vld [vmem:[%s119] ss:$0 sm:$0xff]
    %v121 = vxor.u32 %v120, 2147483648
    %v122 = vlaneseq
    %v123 = vand.u32 %v122, 127
    %vm124 = vcmp.eq.s32.totalorder %v123, 4
    %v125 = vmul.f32 %v121, %v118
    %126 = vadd.xlane.f32.xlu0 %v125
    %v127 = vpop.xlane.xlu0 %126
    %v128 = vsel %vm124, %v127, %v118
    %s129 = scalar_lea.vmem [#allocation2], 5
    %v130 = vld [vmem:[%s129] ss:$0 sm:$0xff]
    %v131 = vxor.u32 %v130, 2147483648
    %v132 = vlaneseq
    %v133 = vand.u32 %v132, 127
    %vm134 = vcmp.eq.s32.totalorder %v133, 5
    %v135 = vmul.f32 %v131, %v128
    %136 = vadd.xlane.f32.xlu0 %v135
    %v137 = vpop.xlane.xlu0 %136
    %v138 = vsel %vm134, %v137, %v128
    %s139 = scalar_lea.vmem [#allocation2], 6
    %v140 = vld [vmem:[%s139] ss:$0 sm:$0xff]
    %v141 = vxor.u32 %v140, 2147483648
    %v142 = vlaneseq
    %v143 = vand.u32 %v142, 127
    %vm144 = vcmp.eq.s32.totalorder %v143, 6
    %v145 = vmul.f32 %v141, %v138
    %146 = vadd.xlane.f32.xlu0 %v145
    %v147 = vpop.xlane.xlu0 %146
    %v148 = vsel %vm144, %v147, %v138
    %s149 = scalar_lea.vmem [#allocation2], 7
    %v150 = vld [vmem:[%s149] ss:$0 sm:$0xff]
    %v151 = vxor.u32 %v150, 2147483648
    %v152 = vlaneseq
    %v153 = vand.u32 %v152, 127
    %vm154 = vcmp.eq.s32.totalorder %v153, 7
    %v155 = vmul.f32 %v151, %v148
    %156 = vadd.xlane.f32.xlu0 %v155
    %v157 = vpop.xlane.xlu0 %156
    %v158 = vsel %vm154, %v157, %v148
    %s159 = scalar_lea.vmem [#allocation2], 8
    %v160 = vld [vmem:[%s159] ss:$0 sm:$0xff]
    %v161 = vxor.u32 %v160, 2147483648
    %v162 = vlaneseq
    %v163 = vand.u32 %v162, 127
    %vm164 = vcmp.eq.s32.totalorder %v163, 8
    %v165 = vmul.f32 %v161, %v158
    %166 = vadd.xlane.f32.xlu0 %v165
    %v167 = vpop.xlane.xlu0 %166
    %v168 = vsel %vm164, %v167, %v158
    %v169 = vmul.f32 %v161, %v88
    %170 = vadd.xlane.f32.xlu0 %v169
    %v171 = vpop.xlane.xlu0 %170
    %v172 = vsel %vm164, %v171, %v88
    %s173 = scalar_lea.vmem [#allocation2], 9
    %v174 = vld [vmem:[%s173] ss:$0 sm:$0xff]
    %v175 = vxor.u32 %v174, 2147483648
    %v176 = vlaneseq
    %v177 = vand.u32 %v176, 127
    %vm178 = vcmp.eq.s32.totalorder %v177, 9
    %v179 = vmul.f32 %v175, %v168
    %180 = vadd.xlane.f32.xlu0 %v179
    %v181 = vpop.xlane.xlu0 %180
    %v182 = vsel %vm178, %v181, %v168
    %v183 = vmul.f32 %v175, %v172
    %184 = vadd.xlane.f32.xlu0 %v183
    %v185 = vpop.xlane.xlu0 %184
    %v186 = vsel %vm178, %v185, %v172
    %s187 = scalar_lea.vmem [#allocation2], 10
    %v188 = vld [vmem:[%s187] ss:$0 sm:$0xff]
    %v189 = vxor.u32 %v188, 2147483648
    %v190 = vlaneseq
    %v191 = vand.u32 %v190, 127
    %vm192 = vcmp.eq.s32.totalorder %v191, 10
    %v193 = vmul.f32 %v189, %v182
    %194 = vadd.xlane.f32.xlu0 %v193
    %v195 = vpop.xlane.xlu0 %194
    %v196 = vsel %vm192, %v195, %v182
    %v197 = vmul.f32 %v189, %v186
    %198 = vadd.xlane.f32.xlu0 %v197
    %v199 = vpop.xlane.xlu0 %198
    %v200 = vsel %vm192, %v199, %v186
    %s201 = scalar_lea.vmem [#allocation2], 11
    %v202 = vld [vmem:[%s201] ss:$0 sm:$0xff]
    %v203 = vxor.u32 %v202, 2147483648
    %v204 = vlaneseq
    %v205 = vand.u32 %v204, 127
    %vm206 = vcmp.eq.s32.totalorder %v205, 11
    %v207 = vmul.f32 %v203, %v196
    %208 = vadd.xlane.f32.xlu0 %v207
    %v209 = vpop.xlane.xlu0 %208
    %v210 = vsel %vm206, %v209, %v196
    %v211 = vmul.f32 %v203, %v200
    %212 = vadd.xlane.f32.xlu0 %v211
    %v213 = vpop.xlane.xlu0 %212
    %v214 = vsel %vm206, %v213, %v200
    %s215 = scalar_lea.vmem [#allocation2], 12
    %v216 = vld [vmem:[%s215] ss:$0 sm:$0xff]
    %v217 = vxor.u32 %v216, 2147483648
    %v218 = vlaneseq
    %v219 = vand.u32 %v218, 127
    %vm220 = vcmp.eq.s32.totalorder %v219, 12
    %v221 = vmul.f32 %v217, %v210
    %222 = vadd.xlane.f32.xlu0 %v221
    %v223 = vpop.xlane.xlu0 %222
    %v224 = vsel %vm220, %v223, %v210
    %v225 = vmul.f32 %v217, %v214
    %226 = vadd.xlane.f32.xlu0 %v225
    %v227 = vpop.xlane.xlu0 %226
    %v228 = vsel %vm220, %v227, %v214
    %s229 = scalar_lea.vmem [#allocation2], 13
    %v230 = vld [vmem:[%s229] ss:$0 sm:$0xff]
    %v231 = vxor.u32 %v230, 2147483648
    %v232 = vlaneseq
    %v233 = vand.u32 %v232, 127
    %vm234 = vcmp.eq.s32.totalorder %v233, 13
    %v235 = vmul.f32 %v231, %v224
    %236 = vadd.xlane.f32.xlu0 %v235
    %v237 = vpop.xlane.xlu0 %236
    %v238 = vsel %vm234, %v237, %v224
    %v239 = vmul.f32 %v231, %v228
    %240 = vadd.xlane.f32.xlu0 %v239
    %v241 = vpop.xlane.xlu0 %240
    %v242 = vsel %vm234, %v241, %v228
    %s243 = scalar_lea.vmem [#allocation2], 14
    %v244 = vld [vmem:[%s243] ss:$0 sm:$0xff]
    %v245 = vxor.u32 %v244, 2147483648
    %v246 = vlaneseq
    %v247 = vand.u32 %v246, 127
    %vm248 = vcmp.eq.s32.totalorder %v247, 14
    %v249 = vmul.f32 %v245, %v238
    %250 = vadd.xlane.f32.xlu0 %v249
    %v251 = vpop.xlane.xlu0 %250
    %v252 = vsel %vm248, %v251, %v238
    %v253 = vmul.f32 %v245, %v242
    %254 = vadd.xlane.f32.xlu0 %v253
    %v255 = vpop.xlane.xlu0 %254
    %v256 = vsel %vm248, %v255, %v242
    %s257 = scalar_lea.vmem [#allocation2], 15
    %v258 = vld [vmem:[%s257] ss:$0 sm:$0xff]
    %v259 = vxor.u32 %v258, 2147483648
    %v260 = vlaneseq
    %v261 = vand.u32 %v260, 127
    %vm262 = vcmp.eq.s32.totalorder %v261, 15
    %v263 = vmul.f32 %v259, %v252
    %264 = vadd.xlane.f32.xlu0 %v263
    %v265 = vpop.xlane.xlu0 %264
    %v266 = vsel %vm262, %v265, %v252
    %v267 = vmul.f32 %v259, %v256
    %268 = vadd.xlane.f32.xlu0 %v267
    %v269 = vpop.xlane.xlu0 %268
    %v270 = vsel %vm262, %v269, %v256
    %v271 = vrcp.pop %v48
    %v272 = vmul.f32 %v266, %v271
    %vm273 = vweird.f32 %v48
    %v274 = vsel %vm273, %v266, %v272
    %275 = vst [vmem:[#allocation1] sm:$0xff] %v274
    %v276 = vrcp.pop %v64
    %v277 = vmul.f32 %v270, %v276
    %vm278 = vweird.f32 %v64
    %v279 = vsel %vm278, %v270, %v277
    %s280 = scalar_lea.vmem [#allocation1], 8
    %281 = vst [vmem:[%s280] sm:$0xff] %v279
    // Predicated region
    $region36: #{custom-call.10} parent=1 // pred_check
      _
    $region37: #{custom-call.10} parent=1 // pred_check_branch
      %283 = sbr.rel (0) target = $region39
    $region38: #{custom-call.10} parent=1 // pred_region
      // Predicated region
      $region40: #{custom-call.10} parent=38 // pred_check
        _
      $region41: #{custom-call.10} parent=38 // pred_check_branch
        %285 = sbr.rel (0) target = $region43
      $region42: #{custom-call.10} parent=38 // pred_region
        // Predicated region
        $region55: #{custom-call.10} parent=42 // pred_check
          _
        $region56: #{custom-call.10} parent=42 // pred_check_branch
          %302 = sbr.rel (0) target = $region58
        $region57: #{custom-call.10} parent=42 // pred_region
          loop: start=0, step=1, limit=1
          $region59: #{custom-call.10} parent=57 // loop_pre_header
            _
          $region60: #{custom-call.10} parent=57 // loop_header
            %s304 = sphi 0, %s308
            %p305 = scmp.ge.s32.totalorder %s304, 1
            %s309 = sphi [#allocation1], [#allocation1]
            %s310 = sphi %s1, %s1
          $region61: #{custom-call.10} parent=57 // loop_header_branch
            %307 = sbr.rel (%p305) target = $region65
          $region62: #{custom-call.10} parent=57 // loop_body
            %v311 = vld [vmem:[%s309] sm:$0xff]
            %312 = vst [vmem:[%s310] sm:$0xff] %v311
            %v313 = vld [vmem:[%s309 + $0x8] sm:$0xff]
            %314 = vst [vmem:[%s310 + $0x8] sm:$0xff] %v313
          $region63: #{custom-call.10} parent=57 // loop_footer
            %s308 = sadd.s32 1, %s304
          $region64: #{custom-call.10} parent=57 // loop_footer_branch
            %303 = sbr.rel target = $region60
          $region65: #{custom-call.10} parent=57 // loop_exit
            _
        $region58: #{custom-call.10} parent=42 // pred_fallthru
          _
        // Predicated region
        $region66: #{custom-call.10} parent=42 // pred_check
          _
        $region67: #{custom-call.10} parent=42 // pred_check_branch
          %316 = sbr.rel target = $region69
        $region68: #{custom-call.10} parent=42 // pred_region
          _
        $region69: #{custom-call.10} parent=42 // pred_fallthru
          _
      $region43: #{custom-call.10} parent=38 // pred_fallthru
        _
      // Predicated region
      $region44: #{custom-call.10} parent=38 // pred_check
        _
      $region45: #{custom-call.10} parent=38 // pred_check_branch
        %287 = sbr.rel target = $region47
      $region46: #{custom-call.10} parent=38 // pred_region
        loop: start=0, step=1, limit=1
        $region48: #{custom-call.10} parent=46 // loop_pre_header
          _
        $region49: #{custom-call.10} parent=46 // loop_header
          %s290 = sphi 0, %s294
          %p291 = scmp.ge.s32.totalorder %s290, 1
          %s295 = sphi [#allocation1], [#allocation1]
          %s296 = sphi %s1, %s1
        $region50: #{custom-call.10} parent=46 // loop_header_branch
          %293 = sbr.rel (%p291) target = $region54
        $region51: #{custom-call.10} parent=46 // loop_body
          %v297 = vld [vmem:[%s295] sm:$0xff]
          %298 = vst [vmem:[%s296] sm:$0xff] %v297
          %v299 = vld [vmem:[%s295 + $0x8] sm:$0xff]
          %300 = vst [vmem:[%s296 + $0x8] sm:$0xff] %v299
        $region52: #{custom-call.10} parent=46 // loop_footer
          %s294 = sadd.s32 1, %s290
        $region53: #{custom-call.10} parent=46 // loop_footer_branch
          %289 = sbr.rel target = $region49
        $region54: #{custom-call.10} parent=46 // loop_exit
          _
      $region47: #{custom-call.10} parent=38 // pred_fallthru
        _
    $region39: #{custom-call.10} parent=1 // pred_fallthru
      _
    %317 = vnop

// kernel: custom-call.9
$region0: #{custom-call.9}
  %s0 = inlined_call_operand.vmem [shape: f32[1,16,16], index: 0, kind: input, shape index: {}]
  %s1 = inlined_call_operand.vmem [shape: f32[1,16,16], index: 1, kind: output, shape index: {}]
  $region1: #{custom-call.9} parent=0
    #allocation0 [shape = 'u8[8192]{0}', space=vmem, size = 0x2000, scoped, tag = 'operand span for operand 0']
    #allocation1 [shape = 'u8[8192]{0}', space=vmem, size = 0x2000, scoped, tag = 'operand span for operand 1']
    #allocation2 [shape = 'f32[16,16]{1,0}', space=vmem, size = 0x2000, scoped, tag = 'rescaled input a']
    // Predicated region
    $region2: #{custom-call.9} parent=1 // pred_check
      _
    $region3: #{custom-call.9} parent=1 // pred_check_branch
      %3 = sbr.rel (0) target = $region5
    $region4: #{custom-call.9} parent=1 // pred_region
      // Predicated region
      $region6: #{custom-call.9} parent=4 // pred_check
        _
      $region7: #{custom-call.9} parent=4 // pred_check_branch
        %5 = sbr.rel (0) target = $region9
      $region8: #{custom-call.9} parent=4 // pred_region
        // Predicated region
        $region21: #{custom-call.9} parent=8 // pred_check
          _
        $region22: #{custom-call.9} parent=8 // pred_check_branch
          %22 = sbr.rel (0) target = $region24
        $region23: #{custom-call.9} parent=8 // pred_region
          loop: start=0, step=1, limit=1
          $region25: #{custom-call.9} parent=23 // loop_pre_header
            _
          $region26: #{custom-call.9} parent=23 // loop_header
            %s24 = sphi 0, %s28
            %p25 = scmp.ge.s32.totalorder %s24, 1
            %s29 = sphi %s0, %s0
            %s30 = sphi [#allocation0], [#allocation0]
          $region27: #{custom-call.9} parent=23 // loop_header_branch
            %27 = sbr.rel (%p25) target = $region31
          $region28: #{custom-call.9} parent=23 // loop_body
            %v31 = vld [vmem:[%s29] sm:$0xff]
            %32 = vst [vmem:[%s30] sm:$0xff] %v31
            %v33 = vld [vmem:[%s29 + $0x8] sm:$0xff]
            %34 = vst [vmem:[%s30 + $0x8] sm:$0xff] %v33
          $region29: #{custom-call.9} parent=23 // loop_footer
            %s28 = sadd.s32 1, %s24
          $region30: #{custom-call.9} parent=23 // loop_footer_branch
            %23 = sbr.rel target = $region26
          $region31: #{custom-call.9} parent=23 // loop_exit
            _
        $region24: #{custom-call.9} parent=8 // pred_fallthru
          _
        // Predicated region
        $region32: #{custom-call.9} parent=8 // pred_check
          _
        $region33: #{custom-call.9} parent=8 // pred_check_branch
          %36 = sbr.rel target = $region35
        $region34: #{custom-call.9} parent=8 // pred_region
          _
        $region35: #{custom-call.9} parent=8 // pred_fallthru
          _
      $region9: #{custom-call.9} parent=4 // pred_fallthru
        _
      // Predicated region
      $region10: #{custom-call.9} parent=4 // pred_check
        _
      $region11: #{custom-call.9} parent=4 // pred_check_branch
        %7 = sbr.rel target = $region13
      $region12: #{custom-call.9} parent=4 // pred_region
        loop: start=0, step=1, limit=1
        $region14: #{custom-call.9} parent=12 // loop_pre_header
          _
        $region15: #{custom-call.9} parent=12 // loop_header
          %s10 = sphi 0, %s14
          %p11 = scmp.ge.s32.totalorder %s10, 1
          %s15 = sphi %s0, %s0
          %s16 = sphi [#allocation0], [#allocation0]
        $region16: #{custom-call.9} parent=12 // loop_header_branch
          %13 = sbr.rel (%p11) target = $region20
        $region17: #{custom-call.9} parent=12 // loop_body
          %v17 = vld [vmem:[%s15] sm:$0xff]
          %18 = vst [vmem:[%s16] sm:$0xff] %v17
          %v19 = vld [vmem:[%s15 + $0x8] sm:$0xff]
          %20 = vst [vmem:[%s16 + $0x8] sm:$0xff] %v19
        $region18: #{custom-call.9} parent=12 // loop_footer
          %s14 = sadd.s32 1, %s10
        $region19: #{custom-call.9} parent=12 // loop_footer_branch
          %9 = sbr.rel target = $region15
        $region20: #{custom-call.9} parent=12 // loop_exit
          _
      $region13: #{custom-call.9} parent=4 // pred_fallthru
        _
    $region5: #{custom-call.9} parent=1 // pred_fallthru
      _
    %37 = vnop
    %v38 = vlaneseq
    %v39 = vand.u32 %v38, 127
    %vm40 = vcmp.lt.s32.totalorder %v39, 16
    %v41 = vlaneseq
    %v42 = vshrl.u32 %v41, 7
    %vm44 = vcmp.eq.s32.totalorder %v42, %v39
    %v45 = vld [vmem:[#allocation0] sm:$0xff]
    %v46 = vsel %vm44, %v45, 0.0
    %47 = vadd.xlane.f32.xlu0 %v46
    %v48 = vpop.xlane.xlu0 %47
    %vm49 = vcmp.le.s32.totalorder %v42, %v39
    %vm50 = vmand %vm49, %vm40
    %v51 = vsel %vm50, %v45, 0.0
    %v52 = vrcp.pop %v48
    %v53 = vmul.f32 %v51, %v52
    %54 = vst [vmem:[#allocation2] sm:$0xff] %v53
    %s55 = scalar_lea.vmem [#allocation0], 8
    %s56 = scalar_lea.vmem [#allocation2], 8
    %v57 = vlaneseq
    %v58 = vshrl.u32 %v57, 7
    %v59 = vadd.s32 %v58, 8
    %vm60 = vcmp.eq.s32.totalorder %v59, %v39
    %v61 = vld [vmem:[%s55] sm:$0xff]
    %v62 = vsel %vm60, %v61, 0.0
    %63 = vadd.xlane.f32.xlu0 %v62
    %v64 = vpop.xlane.xlu0 %63
    %vm65 = vcmp.le.s32.totalorder %v59, %v39
    %vm66 = vmand %vm65, %vm40
    %v67 = vsel %vm66, %v61, 0.0
    %v68 = vrcp.pop %v64
    %v69 = vmul.f32 %v67, %v68
    %70 = vst [vmem:[%s56] sm:$0xff] %v69
    %v71 = vlaneseq
    %v72 = vand.u32 %v71, 127
    %v73 = vlaneseq
    %v74 = vshrl.u32 %v73, 7
    %vm76 = vcmp.eq.s32.totalorder %v72, %v74
    %v77 = vsel %vm76, -1.0, 0.0
    %v78 = vlaneseq
    %v79 = vand.u32 %v78, 127
    %v80 = vlaneseq
    %v81 = vshrl.u32 %v80, 7
    %v82 = vadd.s32 %v81, 8
    %vm83 = vcmp.eq.s32.totalorder %v79, %v82
    %v84 = vlaneseq
    %v85 = vand.u32 %v84, 127
    %vm86 = vcmp.eq.s32.totalorder %v85, 15
    %v87 = vsel %vm86, 1.0, -1.0
    %v88 = vsel %vm83, %v87, 0.0
    %s89 = scalar_lea.vmem [#allocation2], 14
    %v90 = vld [vmem:[%s89] ss:$0 sm:$0xff]
    %v91 = vxor.u32 %v90, 2147483648
    %v92 = vlaneseq
    %v93 = vand.u32 %v92, 127
    %vm94 = vcmp.eq.s32.totalorder %v93, 14
    %v95 = vmul.f32 %v91, %v88
    %96 = vadd.xlane.f32.xlu0 %v95
    %v97 = vpop.xlane.xlu0 %96
    %v98 = vsel %vm94, %v97, %v88
    %s99 = scalar_lea.vmem [#allocation2], 13
    %v100 = vld [vmem:[%s99] ss:$0 sm:$0xff]
    %v101 = vxor.u32 %v100, 2147483648
    %v102 = vlaneseq
    %v103 = vand.u32 %v102, 127
    %vm104 = vcmp.eq.s32.totalorder %v103, 13
    %v105 = vmul.f32 %v101, %v98
    %106 = vadd.xlane.f32.xlu0 %v105
    %v107 = vpop.xlane.xlu0 %106
    %v108 = vsel %vm104, %v107, %v98
    %s109 = scalar_lea.vmem [#allocation2], 12
    %v110 = vld [vmem:[%s109] ss:$0 sm:$0xff]
    %v111 = vxor.u32 %v110, 2147483648
    %v112 = vlaneseq
    %v113 = vand.u32 %v112, 127
    %vm114 = vcmp.eq.s32.totalorder %v113, 12
    %v115 = vmul.f32 %v111, %v108
    %116 = vadd.xlane.f32.xlu0 %v115
    %v117 = vpop.xlane.xlu0 %116
    %v118 = vsel %vm114, %v117, %v108
    %s119 = scalar_lea.vmem [#allocation2], 11
    %v120 = vld [vmem:[%s119] ss:$0 sm:$0xff]
    %v121 = vxor.u32 %v120, 2147483648
    %v122 = vlaneseq
    %v123 = vand.u32 %v122, 127
    %vm124 = vcmp.eq.s32.totalorder %v123, 11
    %v125 = vmul.f32 %v121, %v118
    %126 = vadd.xlane.f32.xlu0 %v125
    %v127 = vpop.xlane.xlu0 %126
    %v128 = vsel %vm124, %v127, %v118
    %s129 = scalar_lea.vmem [#allocation2], 10
    %v130 = vld [vmem:[%s129] ss:$0 sm:$0xff]
    %v131 = vxor.u32 %v130, 2147483648
    %v132 = vlaneseq
    %v133 = vand.u32 %v132, 127
    %vm134 = vcmp.eq.s32.totalorder %v133, 10
    %v135 = vmul.f32 %v131, %v128
    %136 = vadd.xlane.f32.xlu0 %v135
    %v137 = vpop.xlane.xlu0 %136
    %v138 = vsel %vm134, %v137, %v128
    %s139 = scalar_lea.vmem [#allocation2], 9
    %v140 = vld [vmem:[%s139] ss:$0 sm:$0xff]
    %v141 = vxor.u32 %v140, 2147483648
    %v142 = vlaneseq
    %v143 = vand.u32 %v142, 127
    %vm144 = vcmp.eq.s32.totalorder %v143, 9
    %v145 = vmul.f32 %v141, %v138
    %146 = vadd.xlane.f32.xlu0 %v145
    %v147 = vpop.xlane.xlu0 %146
    %v148 = vsel %vm144, %v147, %v138
    %s149 = scalar_lea.vmem [#allocation2], 8
    %v150 = vld [vmem:[%s149] ss:$0 sm:$0xff]
    %v151 = vxor.u32 %v150, 2147483648
    %v152 = vlaneseq
    %v153 = vand.u32 %v152, 127
    %vm154 = vcmp.eq.s32.totalorder %v153, 8
    %v155 = vmul.f32 %v151, %v148
    %156 = vadd.xlane.f32.xlu0 %v155
    %v157 = vpop.xlane.xlu0 %156
    %v158 = vsel %vm154, %v157, %v148
    %s159 = scalar_lea.vmem [#allocation2], 7
    %v160 = vld [vmem:[%s159] ss:$0 sm:$0xff]
    %v161 = vxor.u32 %v160, 2147483648
    %v162 = vlaneseq
    %v163 = vand.u32 %v162, 127
    %vm164 = vcmp.eq.s32.totalorder %v163, 7
    %v165 = vmul.f32 %v161, %v77
    %166 = vadd.xlane.f32.xlu0 %v165
    %v167 = vpop.xlane.xlu0 %166
    %v168 = vsel %vm164, %v167, %v77
    %v169 = vmul.f32 %v161, %v158
    %170 = vadd.xlane.f32.xlu0 %v169
    %v171 = vpop.xlane.xlu0 %170
    %v172 = vsel %vm164, %v171, %v158
    %s173 = scalar_lea.vmem [#allocation2], 6
    %v174 = vld [vmem:[%s173] ss:$0 sm:$0xff]
    %v175 = vxor.u32 %v174, 2147483648
    %v176 = vlaneseq
    %v177 = vand.u32 %v176, 127
    %vm178 = vcmp.eq.s32.totalorder %v177, 6
    %v179 = vmul.f32 %v175, %v168
    %180 = vadd.xlane.f32.xlu0 %v179
    %v181 = vpop.xlane.xlu0 %180
    %v182 = vsel %vm178, %v181, %v168
    %v183 = vmul.f32 %v175, %v172
    %184 = vadd.xlane.f32.xlu0 %v183
    %v185 = vpop.xlane.xlu0 %184
    %v186 = vsel %vm178, %v185, %v172
    %s187 = scalar_lea.vmem [#allocation2], 5
    %v188 = vld [vmem:[%s187] ss:$0 sm:$0xff]
    %v189 = vxor.u32 %v188, 2147483648
    %v190 = vlaneseq
    %v191 = vand.u32 %v190, 127
    %vm192 = vcmp.eq.s32.totalorder %v191, 5
    %v193 = vmul.f32 %v189, %v182
    %194 = vadd.xlane.f32.xlu0 %v193
    %v195 = vpop.xlane.xlu0 %194
    %v196 = vsel %vm192, %v195, %v182
    %v197 = vmul.f32 %v189, %v186
    %198 = vadd.xlane.f32.xlu0 %v197
    %v199 = vpop.xlane.xlu0 %198
    %v200 = vsel %vm192, %v199, %v186
    %s201 = scalar_lea.vmem [#allocation2], 4
    %v202 = vld [vmem:[%s201] ss:$0 sm:$0xff]
    %v203 = vxor.u32 %v202, 2147483648
    %v204 = vlaneseq
    %v205 = vand.u32 %v204, 127
    %vm206 = vcmp.eq.s32.totalorder %v205, 4
    %v207 = vmul.f32 %v203, %v196
    %208 = vadd.xlane.f32.xlu0 %v207
    %v209 = vpop.xlane.xlu0 %208
    %v210 = vsel %vm206, %v209, %v196
    %v211 = vmul.f32 %v203, %v200
    %212 = vadd.xlane.f32.xlu0 %v211
    %v213 = vpop.xlane.xlu0 %212
    %v214 = vsel %vm206, %v213, %v200
    %s215 = scalar_lea.vmem [#allocation2], 3
    %v216 = vld [vmem:[%s215] ss:$0 sm:$0xff]
    %v217 = vxor.u32 %v216, 2147483648
    %v218 = vlaneseq
    %v219 = vand.u32 %v218, 127
    %vm220 = vcmp.eq.s32.totalorder %v219, 3
    %v221 = vmul.f32 %v217, %v210
    %222 = vadd.xlane.f32.xlu0 %v221
    %v223 = vpop.xlane.xlu0 %222
    %v224 = vsel %vm220, %v223, %v210
    %v225 = vmul.f32 %v217, %v214
    %226 = vadd.xlane.f32.xlu0 %v225
    %v227 = vpop.xlane.xlu0 %226
    %v228 = vsel %vm220, %v227, %v214
    %s229 = scalar_lea.vmem [#allocation2], 2
    %v230 = vld [vmem:[%s229] ss:$0 sm:$0xff]
    %v231 = vxor.u32 %v230, 2147483648
    %v232 = vlaneseq
    %v233 = vand.u32 %v232, 127
    %vm234 = vcmp.eq.s32.totalorder %v233, 2
    %v235 = vmul.f32 %v231, %v224
    %236 = vadd.xlane.f32.xlu0 %v235
    %v237 = vpop.xlane.xlu0 %236
    %v238 = vsel %vm234, %v237, %v224
    %v239 = vmul.f32 %v231, %v228
    %240 = vadd.xlane.f32.xlu0 %v239
    %v241 = vpop.xlane.xlu0 %240
    %v242 = vsel %vm234, %v241, %v228
    %s243 = scalar_lea.vmem [#allocation2], 1
    %v244 = vld [vmem:[%s243] ss:$0 sm:$0xff]
    %v245 = vxor.u32 %v244, 2147483648
    %v246 = vlaneseq
    %v247 = vand.u32 %v246, 127
    %vm248 = vcmp.eq.s32.totalorder %v247, 1
    %v249 = vmul.f32 %v245, %v238
    %250 = vadd.xlane.f32.xlu0 %v249
    %v251 = vpop.xlane.xlu0 %250
    %v252 = vsel %vm248, %v251, %v238
    %v253 = vmul.f32 %v245, %v242
    %254 = vadd.xlane.f32.xlu0 %v253
    %v255 = vpop.xlane.xlu0 %254
    %v256 = vsel %vm248, %v255, %v242
    %v257 = vld [vmem:[#allocation2] ss:$0 sm:$0xff]
    %v258 = vxor.u32 %v257, 2147483648
    %v259 = vlaneseq
    %v260 = vand.u32 %v259, 127
    %vm261 = vcmp.eq.s32.totalorder %v260, 0
    %v262 = vmul.f32 %v258, %v252
    %263 = vadd.xlane.f32.xlu0 %v262
    %v264 = vpop.xlane.xlu0 %263
    %v265 = vsel %vm261, %v264, %v252
    %v266 = vmul.f32 %v258, %v256
    %267 = vadd.xlane.f32.xlu0 %v266
    %v268 = vpop.xlane.xlu0 %267
    %v269 = vsel %vm261, %v268, %v256
    %v270 = vrcp.pop %v48
    %v271 = vmul.f32 %v265, %v270
    %vm272 = vweird.f32 %v48
    %v273 = vsel %vm272, %v265, %v271
    %274 = vst [vmem:[#allocation1] sm:$0xff] %v273
    %v275 = vrcp.pop %v64
    %v276 = vmul.f32 %v269, %v275
    %vm277 = vweird.f32 %v64
    %v278 = vsel %vm277, %v269, %v276
    %s279 = scalar_lea.vmem [#allocation1], 8
    %280 = vst [vmem:[%s279] sm:$0xff] %v278
    // Predicated region
    $region36: #{custom-call.9} parent=1 // pred_check
      _
    $region37: #{custom-call.9} parent=1 // pred_check_branch
      %282 = sbr.rel (0) target = $region39
    $region38: #{custom-call.9} parent=1 // pred_region
      // Predicated region
      $region40: #{custom-call.9} parent=38 // pred_check
        _
      $region41: #{custom-call.9} parent=38 // pred_check_branch
        %284 = sbr.rel (0) target = $region43
      $region42: #{custom-call.9} parent=38 // pred_region
        // Predicated region
        $region55: #{custom-call.9} parent=42 // pred_check
          _
        $region56: #{custom-call.9} parent=42 // pred_check_branch
          %301 = sbr.rel (0) target = $region58
        $region57: #{custom-call.9} parent=42 // pred_region
          loop: start=0, step=1, limit=1
          $region59: #{custom-call.9} parent=57 // loop_pre_header
            _
          $region60: #{custom-call.9} parent=57 // loop_header
            %s303 = sphi 0, %s307
            %p304 = scmp.ge.s32.totalorder %s303, 1
            %s308 = sphi [#allocation1], [#allocation1]
            %s309 = sphi %s1, %s1
          $region61: #{custom-call.9} parent=57 // loop_header_branch
            %306 = sbr.rel (%p304) target = $region65
          $region62: #{custom-call.9} parent=57 // loop_body
            %v310 = vld [vmem:[%s308] sm:$0xff]
            %311 = vst [vmem:[%s309] sm:$0xff] %v310
            %v312 = vld [vmem:[%s308 + $0x8] sm:$0xff]
            %313 = vst [vmem:[%s309 + $0x8] sm:$0xff] %v312
          $region63: #{custom-call.9} parent=57 // loop_footer
            %s307 = sadd.s32 1, %s303
          $region64: #{custom-call.9} parent=57 // loop_footer_branch
            %302 = sbr.rel target = $region60
          $region65: #{custom-call.9} parent=57 // loop_exit
            _
        $region58: #{custom-call.9} parent=42 // pred_fallthru
          _
        // Predicated region
        $region66: #{custom-call.9} parent=42 // pred_check
          _
        $region67: #{custom-call.9} parent=42 // pred_check_branch
          %315 = sbr.rel target = $region69
        $region68: #{custom-call.9} parent=42 // pred_region
          _
        $region69: #{custom-call.9} parent=42 // pred_fallthru
          _
      $region43: #{custom-call.9} parent=38 // pred_fallthru
        _
      // Predicated region
      $region44: #{custom-call.9} parent=38 // pred_check
        _
      $region45: #{custom-call.9} parent=38 // pred_check_branch
        %286 = sbr.rel target = $region47
      $region46: #{custom-call.9} parent=38 // pred_region
        loop: start=0, step=1, limit=1
        $region48: #{custom-call.9} parent=46 // loop_pre_header
          _
        $region49: #{custom-call.9} parent=46 // loop_header
          %s289 = sphi 0, %s293
          %p290 = scmp.ge.s32.totalorder %s289, 1
          %s294 = sphi [#allocation1], [#allocation1]
          %s295 = sphi %s1, %s1
        $region50: #{custom-call.9} parent=46 // loop_header_branch
          %292 = sbr.rel (%p290) target = $region54
        $region51: #{custom-call.9} parent=46 // loop_body
          %v296 = vld [vmem:[%s294] sm:$0xff]
          %297 = vst [vmem:[%s295] sm:$0xff] %v296
          %v298 = vld [vmem:[%s294 + $0x8] sm:$0xff]
          %299 = vst [vmem:[%s295 + $0x8] sm:$0xff] %v298
        $region52: #{custom-call.9} parent=46 // loop_footer
          %s293 = sadd.s32 1, %s289
        $region53: #{custom-call.9} parent=46 // loop_footer_branch
          %288 = sbr.rel target = $region49
        $region54: #{custom-call.9} parent=46 // loop_exit
          _
      $region47: #{custom-call.9} parent=38 // pred_fallthru
        _
    $region39: #{custom-call.9} parent=1 // pred_fallthru
      _
    %316 = vnop

</llo_original>
